<compile_context>
chip_gen: v7x
topology: tpu7x:2x2x1
jax: 0.10.0
libtpu: 0.0.40
codegen_flags: <defaults>
</compile_context>

<pallas_src>
import functools

import jax
import jax.numpy as jnp
from jax import lax
from jax.experimental import pallas as pl
from jax.experimental.pallas import tpu as pltpu

T = 8    # max sequence length
B = 4    # batch size
H = 32   # hidden_size
V = 20   # vocabulary size (voc.num_words)


# ----------------------------- fused Pallas kernel -----------------------------

def _bigru_kernel(xg_ref, len_ref, whh_ref, bhn_ref, out_ref, hid_ref,
                  *, seq_len, batch, hidden):
    f32 = jnp.float32
    H1, H2, H4, H6 = hidden, 2 * hidden, 4 * hidden, 6 * hidden

    # ---- hoisted once per invocation ------------------------------------------------
    whh = whh_ref[...]                                      # (2H, 6H) bf16 block-diagonal
    bhn = jnp.broadcast_to(bhn_ref[...], (batch, H2))       # (B, 2H) f32: [b_hn_f | b_hn_b]

    lens = jnp.broadcast_to(len_ref[...], (batch, H2))      # (B, 2H) int32
    lane = lax.broadcasted_iota(jnp.int32, (batch, H2), 1)
    is_fwd = lane < H1                                      # fwd lanes [0,H), bwd lanes [H,2H)
    masks = []
    for s in range(seq_len):
        t_eff = jnp.where(is_fwd, s, seq_len - 1 - s)       # per-lane effective timestep
        masks.append((lens > t_eff).astype(f32))            # pack/pad mask for step s

    # ---- interleaved bidirectional recurrence ----------------------------------------
    # h = [h_fwd | h_bwd] along lanes.  At step s the fwd half consumes timestep s and the
    # bwd half consumes timestep T-1-s; ONE block-diagonal recurrent matmul per step.
    h = jnp.zeros((batch, H2), f32)
    for s in range(seq_len):
        xg = xg_ref[s]                                      # (B, 6H) pre-projected x-gates
        hg = jnp.dot(h.astype(jnp.bfloat16), whh,
                     preferred_element_type=f32)            # (B, 6H)

        # gate-major columns: [r_f r_b | z_f z_b | n_f n_b]; r/z biases already folded in xg
        r = jax.nn.sigmoid(xg[:, :H2] + hg[:, :H2])
        z = jax.nn.sigmoid(xg[:, H2:H4] + hg[:, H2:H4])
        n = jnp.tanh(xg[:, H4:H6] + r * (hg[:, H4:H6] + bhn))
        h_new = (1.0 - z) * n + z * h

        m = masks[s]
        o = m * h_new                                       # padded step: emit zeros
        h = o + (1.0 - m) * h                               # padded step: carry state

        # scatter: fwd half is output[t=s], bwd half is output[t=T-1-s]; module sums them.
        o_f = o[:, :H1]
        o_b = o[:, H1:H2]
        tb = seq_len - 1 - s
        if s < tb:                                          # first touch of both rows
            out_ref[s] = o_f
            out_ref[tb] = o_b
        elif s == tb:                                       # odd-length midpoint (unused, T even)
            out_ref[s] = o_f + o_b
        else:                                               # second touch: accumulate
            out_ref[s] = out_ref[s] + o_f
            out_ref[tb] = out_ref[tb] + o_b

    hid_ref[0] = h[:, :H1]                                  # final forward hidden
    hid_ref[1] = h[:, H1:H2]                                # final backward hidden


# ----------------------------- weight preparation -----------------------------

def _gate_split_t(w):
    # PyTorch (3H, H) with gate rows [r; z; n] -> (3, H, H), each slice = W_gate^T
    return w.reshape(3, H, H).transpose(0, 2, 1)


def _prepare_weights(params):
    f32 = jnp.float32
    wif = _gate_split_t(params["w_ih_f"])
    wib = _gate_split_t(params["w_ih_b"])
    whf = _gate_split_t(params["w_hh_f"])
    whb = _gate_split_t(params["w_hh_b"])
    bif = params["b_ih_f"].reshape(3, H)
    bhf = params["b_hh_f"].reshape(3, H)
    bib = params["b_ih_b"].reshape(3, H)
    bhb = params["b_hh_b"].reshape(3, H)

    # Column layout (gate-major, direction-interleaved): [r_f r_b z_f z_b n_f n_b]
    wih_all = jnp.concatenate([wif[0], wib[0], wif[1], wib[1], wif[2], wib[2]],
                              axis=1)                                   # (H, 6H)
    # Fold biases: r,z get b_ih + b_hh; n gets only b_ih (b_hh_n must stay in-loop).
    b_all = jnp.concatenate([bif[0] + bhf[0], bib[0] + bhb[0],
                             bif[1] + bhf[1], bib[1] + bhb[1],
                             bif[2],          bib[2]])                   # (6H,)

    zero = jnp.zeros((H, H), f32)
    whh_blk = jnp.concatenate([
        jnp.concatenate([whf[0], zero], axis=0), jnp.concatenate([zero, whb[0]], axis=0),
        jnp.concatenate([whf[1], zero], axis=0), jnp.concatenate([zero, whb[1]], axis=0),
        jnp.concatenate([whf[2], zero], axis=0), jnp.concatenate([zero, whb[2]], axis=0),
    ], axis=1)                                                           # (2H, 6H) block-diag
    b_hn = jnp.concatenate([bhf[2], bhb[2]]).reshape(1, 2 * H)           # (1, 2H)
    return wih_all, b_all, whh_blk.astype(jnp.bfloat16), b_hn


# ----------------------------- EncoderRNN forward -----------------------------

def encoder_rnn_forward(params, input_seq, input_lengths):
    f32 = jnp.float32
    wih_all, b_all, whh_blk, b_hn = _prepare_weights(params)

    # Hoisted input-side projection: project the tiny (V, H) embedding table ONCE through all
    # six input-gate weight blocks (+ folded biases), then gather per-token (T, B, 6H) rows.
    # TODO(synk): the row gather itself stays as one XLA take (in-kernel SMEM-indexed gather
    # not worth the lowering risk at V=20).
    proj = jnp.dot(params["embedding"].astype(f32), wih_all) + b_all[None, :]   # (V, 6H)
    xg_tok = jnp.take(proj, input_seq, axis=0)                                  # (T, B, 6H)

    # Direction interleave: at step s the fwd half uses timestep s and the bwd half uses
    # timestep T-1-s, so pre-select the bwd gate columns from the time-reversed gather.
    is_fwd_col = ((jnp.arange(6 * H) // H) % 2 == 0)[None, None, :]
    xg = jnp.where(is_fwd_col, xg_tok, xg_tok[::-1])                            # (T, B, 6H)

    lengths = input_lengths.astype(jnp.int32).reshape(B, 1)

    vmem = pl.BlockSpec(memory_space=pltpu.MemorySpace.VMEM)
    outputs, hidden = pl.pallas_call(
        functools.partial(_bigru_kernel, seq_len=T, batch=B, hidden=H),
        out_shape=(jax.ShapeDtypeStruct((T, B, H), f32),
                   jax.ShapeDtypeStruct((2, B, H), f32)),
        in_specs=[vmem, vmem, vmem, vmem],
        out_specs=(vmem, vmem),
    )(xg, lengths, whh_blk, b_hn)
    return outputs, hidden


# ----------------------------- Pure-JAX reference -----------------------------

def ref_forward(params, input_seq, input_lengths):
    emb = jnp.take(params["embedding"], input_seq, axis=0).astype(jnp.float32)
    mask_tb = (jnp.arange(T)[:, None] < input_lengths[None, :]).astype(jnp.float32)

    def run_dir(w_ih, w_hh, b_ih, b_hh, reverse):
        def step(h, inp):
            x, m = inp
            gi = x @ w_ih.T + b_ih
            gh = h @ w_hh.T + b_hh
            r = jax.nn.sigmoid(gi[:, :H] + gh[:, :H])
            z = jax.nn.sigmoid(gi[:, H:2 * H] + gh[:, H:2 * H])
            n = jnp.tanh(gi[:, 2 * H:] + r * gh[:, 2 * H:])
            h_new = (1.0 - z) * n + z * h
            m_ = m[:, None]
            h_out = m_ * h_new + (1.0 - m_) * h
            return h_out, m_ * h_new

        xs = (emb[::-1], mask_tb[::-1]) if reverse else (emb, mask_tb)
        h_fin, outs = lax.scan(step, jnp.zeros((B, H), jnp.float32), xs)
        if reverse:
            outs = outs[::-1]
        return outs, h_fin

    out_f, h_f = run_dir(params["w_ih_f"], params["w_hh_f"],
                         params["b_ih_f"], params["b_hh_f"], False)
    out_b, h_b = run_dir(params["w_ih_b"], params["w_hh_b"],
                         params["b_ih_b"], params["b_hh_b"], True)
    return out_f + out_b, jnp.stack([h_f, h_b], axis=0)


# ----------------------------- Parameter init -----------------------------

def init_params(key):
    ks = jax.random.split(key, 9)
    k_init = 1.0 / jnp.sqrt(H)
    u = lambda k, shape: jax.random.uniform(k, shape, jnp.float32, -k_init, k_init)
    return {
        "embedding": jax.random.normal(ks[0], (V, H), jnp.float32),
        "w_ih_f": u(ks[1], (3 * H, H)), "w_hh_f": u(ks[2], (3 * H, H)),
        "b_ih_f": u(ks[3], (3 * H,)),   "b_hh_f": u(ks[4], (3 * H,)),
        "w_ih_b": u(ks[5], (3 * H, H)), "w_hh_b": u(ks[6], (3 * H, H)),
        "b_ih_b": u(ks[7], (3 * H,)),   "b_hh_b": u(ks[8], (3 * H,)),
    }


if __name__ == "__main__":
    key = jax.random.PRNGKey(0)
    k_p, k_seq = jax.random.split(key)
    params = init_params(k_p)

    input_seq = jax.random.randint(k_seq, (T, B), 0, V, dtype=jnp.int32)   # (T, B)
    input_lengths = jnp.array([8, 7, 5, 3], dtype=jnp.int32)               # sorted descending

    outputs, hidden = jax.jit(encoder_rnn_forward)(params, input_seq, input_lengths)
    jax.block_until_ready((outputs, hidden))

    ref_out, ref_hid = ref_forward(params, input_seq, input_lengths)
    assert outputs.shape == (T, B, H) and hidden.shape == (2, B, H)
    # bf16 recurrent-matmul operands (f32 accumulate) -> tolerance loosened vs f32 reference.
    assert jnp.allclose(outputs, ref_out, atol=2e-2, rtol=2e-2)
    assert jnp.allclose(hidden, ref_hid, atol=2e-2, rtol=2e-2)

    print("KERNEL_OK")
</pallas_src>

<mosaic_0001>
module attributes {stable_mosaic.version = 11 : i64} {
  func.func @_bigru_kernel(%arg0: memref<8x4x192xf32, #tpu.memory_space<vmem>>, %arg1: memref<4x1xi32, #tpu.memory_space<vmem>>, %arg2: memref<64x192xbf16, #tpu.memory_space<vmem>>, %arg3: memref<1x64xf32, #tpu.memory_space<vmem>>, %arg4: memref<8x4x32xf32, #tpu.memory_space<vmem>>, %arg5: memref<2x4x32xf32, #tpu.memory_space<vmem>>) attributes {dimension_semantics = [], scalar_prefetch = 0 : i64, scratch_operands = 0 : i64, tpu.core_type = #tpu.core_type<tc>} {
    %c0 = arith.constant 0 : index
    %c0_0 = arith.constant 0 : index
    %0 = vector.load %arg2[%c0, %c0_0] : memref<64x192xbf16, #tpu.memory_space<vmem>>, vector<64x192xbf16>
    %c0_1 = arith.constant 0 : index
    %c0_2 = arith.constant 0 : index
    %1 = vector.load %arg3[%c0_1, %c0_2] : memref<1x64xf32, #tpu.memory_space<vmem>>, vector<1x64xf32>
    %2 = vector.shape_cast %1 : vector<1x64xf32> to vector<1x64xf32>
    %3 = vector.broadcast %2 : vector<1x64xf32> to vector<4x64xf32>
    %c0_3 = arith.constant 0 : index
    %c0_4 = arith.constant 0 : index
    %4 = vector.load %arg1[%c0_3, %c0_4] : memref<4x1xi32, #tpu.memory_space<vmem>>, vector<4x1xi32>
    %5 = vector.shape_cast %4 : vector<4x1xi32> to vector<4x1xi32>
    %6 = vector.broadcast %5 : vector<4x1xi32> to vector<4x64xi32>
    %7 = tpu.iota {dimensions = array<i32: 1>} : vector<4x64xi32>
    %c32_i32 = arith.constant 32 : i32
    %8 = vector.broadcast %c32_i32 : i32 to vector<4x64xi32>
    %9 = arith.cmpi slt, %7, %8 : vector<4x64xi32>
    %c0_i32 = arith.constant 0 : i32
    %c7_i32 = arith.constant 7 : i32
    %10 = vector.broadcast %c0_i32 : i32 to vector<4x64xi32>
    %11 = vector.broadcast %c7_i32 : i32 to vector<4x64xi32>
    %12 = arith.select %9, %10, %11 : vector<4x64xi1>, vector<4x64xi32>
    %13 = arith.cmpi sgt, %6, %12 : vector<4x64xi32>
    %14 = arith.extui %13 : vector<4x64xi1> to vector<4x64xi32>
    %15 = arith.sitofp %14 : vector<4x64xi32> to vector<4x64xf32>
    %c1_i32 = arith.constant 1 : i32
    %c6_i32 = arith.constant 6 : i32
    %16 = vector.broadcast %c1_i32 : i32 to vector<4x64xi32>
    %17 = vector.broadcast %c6_i32 : i32 to vector<4x64xi32>
    %18 = arith.select %9, %16, %17 : vector<4x64xi1>, vector<4x64xi32>
    %19 = arith.cmpi sgt, %6, %18 : vector<4x64xi32>
    %20 = arith.extui %19 : vector<4x64xi1> to vector<4x64xi32>
    %21 = arith.sitofp %20 : vector<4x64xi32> to vector<4x64xf32>
    %c2_i32 = arith.constant 2 : i32
    %c5_i32 = arith.constant 5 : i32
    %22 = vector.broadcast %c2_i32 : i32 to vector<4x64xi32>
    %23 = vector.broadcast %c5_i32 : i32 to vector<4x64xi32>
    %24 = arith.select %9, %22, %23 : vector<4x64xi1>, vector<4x64xi32>
    %25 = arith.cmpi sgt, %6, %24 : vector<4x64xi32>
    %26 = arith.extui %25 : vector<4x64xi1> to vector<4x64xi32>
    %27 = arith.sitofp %26 : vector<4x64xi32> to vector<4x64xf32>
    %c3_i32 = arith.constant 3 : i32
    %c4_i32 = arith.constant 4 : i32
    %28 = vector.broadcast %c3_i32 : i32 to vector<4x64xi32>
    %29 = vector.broadcast %c4_i32 : i32 to vector<4x64xi32>
    %30 = arith.select %9, %28, %29 : vector<4x64xi1>, vector<4x64xi32>
    %31 = arith.cmpi sgt, %6, %30 : vector<4x64xi32>
    %32 = arith.extui %31 : vector<4x64xi1> to vector<4x64xi32>
    %33 = arith.sitofp %32 : vector<4x64xi32> to vector<4x64xf32>
    %c4_i32_5 = arith.constant 4 : i32
    %c3_i32_6 = arith.constant 3 : i32
    %34 = vector.broadcast %c4_i32_5 : i32 to vector<4x64xi32>
    %35 = vector.broadcast %c3_i32_6 : i32 to vector<4x64xi32>
    %36 = arith.select %9, %34, %35 : vector<4x64xi1>, vector<4x64xi32>
    %37 = arith.cmpi sgt, %6, %36 : vector<4x64xi32>
    %38 = arith.extui %37 : vector<4x64xi1> to vector<4x64xi32>
    %39 = arith.sitofp %38 : vector<4x64xi32> to vector<4x64xf32>
    %c5_i32_7 = arith.constant 5 : i32
    %c2_i32_8 = arith.constant 2 : i32
    %40 = vector.broadcast %c5_i32_7 : i32 to vector<4x64xi32>
    %41 = vector.broadcast %c2_i32_8 : i32 to vector<4x64xi32>
    %42 = arith.select %9, %40, %41 : vector<4x64xi1>, vector<4x64xi32>
    %43 = arith.cmpi sgt, %6, %42 : vector<4x64xi32>
    %44 = arith.extui %43 : vector<4x64xi1> to vector<4x64xi32>
    %45 = arith.sitofp %44 : vector<4x64xi32> to vector<4x64xf32>
    %c6_i32_9 = arith.constant 6 : i32
    %c1_i32_10 = arith.constant 1 : i32
    %46 = vector.broadcast %c6_i32_9 : i32 to vector<4x64xi32>
    %47 = vector.broadcast %c1_i32_10 : i32 to vector<4x64xi32>
    %48 = arith.select %9, %46, %47 : vector<4x64xi1>, vector<4x64xi32>
    %49 = arith.cmpi sgt, %6, %48 : vector<4x64xi32>
    %50 = arith.extui %49 : vector<4x64xi1> to vector<4x64xi32>
    %51 = arith.sitofp %50 : vector<4x64xi32> to vector<4x64xf32>
    %c7_i32_11 = arith.constant 7 : i32
    %c0_i32_12 = arith.constant 0 : i32
    %52 = vector.broadcast %c7_i32_11 : i32 to vector<4x64xi32>
    %53 = vector.broadcast %c0_i32_12 : i32 to vector<4x64xi32>
    %54 = arith.select %9, %52, %53 : vector<4x64xi1>, vector<4x64xi32>
    %55 = arith.cmpi sgt, %6, %54 : vector<4x64xi32>
    %56 = arith.extui %55 : vector<4x64xi1> to vector<4x64xi32>
    %57 = arith.sitofp %56 : vector<4x64xi32> to vector<4x64xf32>
    %cst = arith.constant 0.000000e+00 : f32
    %58 = vector.broadcast %cst : f32 to vector<4x64xf32>
    %c0_13 = arith.constant 0 : index
    %c0_14 = arith.constant 0 : index
    %c0_15 = arith.constant 0 : index
    %59 = vector.load %arg0[%c0_13, %c0_14, %c0_15] : memref<8x4x192xf32, #tpu.memory_space<vmem>>, vector<1x4x192xf32>
    %60 = vector.shape_cast %59 : vector<1x4x192xf32> to vector<4x192xf32>
    %61 = arith.truncf %58 : vector<4x64xf32> to vector<4x64xbf16>
    %cst_16 = arith.constant dense<0.000000e+00> : vector<4x192xf32>
    %62 = tpu.matmul %61, %0, %cst_16 {dimension_numbers = #tpu.dot_dimension_numbers<[1], [0], [0], [1], [0, 0, 1, 1], [], []>} : vector<4x64xbf16>, vector<64x192xbf16>, vector<4x192xf32> -> vector<4x192xf32>
    %63 = vector.extract_strided_slice %60 {offsets = [0, 0], sizes = [4, 64], strides = [1, 1]} : vector<4x192xf32> to vector<4x64xf32>
    %64 = vector.extract_strided_slice %62 {offsets = [0, 0], sizes = [4, 64], strides = [1, 1]} : vector<4x192xf32> to vector<4x64xf32>
    %65 = arith.addf %63, %64 : vector<4x64xf32>
    %66 = arith.negf %65 : vector<4x64xf32>
    %67 = math.exp %66 : vector<4x64xf32>
    %cst_17 = arith.constant 1.000000e+00 : f32
    %68 = vector.broadcast %cst_17 : f32 to vector<4x64xf32>
    %69 = arith.addf %68, %67 : vector<4x64xf32>
    %70 = arith.divf %68, %69 : vector<4x64xf32>
    %71 = vector.extract_strided_slice %60 {offsets = [0, 64], sizes = [4, 64], strides = [1, 1]} : vector<4x192xf32> to vector<4x64xf32>
    %72 = vector.extract_strided_slice %62 {offsets = [0, 64], sizes = [4, 64], strides = [1, 1]} : vector<4x192xf32> to vector<4x64xf32>
    %73 = arith.addf %71, %72 : vector<4x64xf32>
    %74 = arith.negf %73 : vector<4x64xf32>
    %75 = math.exp %74 : vector<4x64xf32>
    %cst_18 = arith.constant 1.000000e+00 : f32
    %76 = vector.broadcast %cst_18 : f32 to vector<4x64xf32>
    %77 = arith.addf %76, %75 : vector<4x64xf32>
    %78 = arith.divf %76, %77 : vector<4x64xf32>
    %79 = vector.extract_strided_slice %60 {offsets = [0, 128], sizes = [4, 64], strides = [1, 1]} : vector<4x192xf32> to vector<4x64xf32>
    %80 = vector.extract_strided_slice %62 {offsets = [0, 128], sizes = [4, 64], strides = [1, 1]} : vector<4x192xf32> to vector<4x64xf32>
    %81 = arith.addf %80, %3 : vector<4x64xf32>
    %82 = arith.mulf %70, %81 : vector<4x64xf32>
    %83 = arith.addf %79, %82 : vector<4x64xf32>
    %84 = math.tanh %83 : vector<4x64xf32>
    %cst_19 = arith.constant 1.000000e+00 : f32
    %85 = vector.broadcast %cst_19 : f32 to vector<4x64xf32>
    %86 = arith.subf %85, %78 : vector<4x64xf32>
    %87 = arith.mulf %86, %84 : vector<4x64xf32>
    %88 = arith.mulf %78, %58 : vector<4x64xf32>
    %89 = arith.addf %87, %88 : vector<4x64xf32>
    %90 = arith.mulf %15, %89 : vector<4x64xf32>
    %cst_20 = arith.constant 1.000000e+00 : f32
    %91 = vector.broadcast %cst_20 : f32 to vector<4x64xf32>
    %92 = arith.subf %91, %15 : vector<4x64xf32>
    %93 = arith.mulf %92, %58 : vector<4x64xf32>
    %94 = arith.addf %90, %93 : vector<4x64xf32>
    %95 = vector.extract_strided_slice %90 {offsets = [0, 0], sizes = [4, 32], strides = [1, 1]} : vector<4x64xf32> to vector<4x32xf32>
    %96 = vector.extract_strided_slice %90 {offsets = [0, 32], sizes = [4, 32], strides = [1, 1]} : vector<4x64xf32> to vector<4x32xf32>
    %c0_21 = arith.constant 0 : index
    %c0_22 = arith.constant 0 : index
    %c0_23 = arith.constant 0 : index
    %97 = vector.load %arg4[%c0_21, %c0_22, %c0_23] : memref<8x4x32xf32, #tpu.memory_space<vmem>>, vector<1x4x32xf32>
    %98 = vector.shape_cast %97 : vector<1x4x32xf32> to vector<4x32xf32>
    %99 = vector.shape_cast %95 : vector<4x32xf32> to vector<1x4x32xf32>
    tpu.vector_store %arg4[%c0_21, %c0_22, %c0_23], %99 {strides = array<i32>} : memref<8x4x32xf32, #tpu.memory_space<vmem>>, vector<1x4x32xf32>,
    %c7 = arith.constant 7 : index
    %c0_24 = arith.constant 0 : index
    %c0_25 = arith.constant 0 : index
    %100 = vector.load %arg4[%c7, %c0_24, %c0_25] : memref<8x4x32xf32, #tpu.memory_space<vmem>>, vector<1x4x32xf32>
    %101 = vector.shape_cast %100 : vector<1x4x32xf32> to vector<4x32xf32>
    %102 = vector.shape_cast %96 : vector<4x32xf32> to vector<1x4x32xf32>
    tpu.vector_store %arg4[%c7, %c0_24, %c0_25], %102 {strides = array<i32>} : memref<8x4x32xf32, #tpu.memory_space<vmem>>, vector<1x4x32xf32>,
    %c1 = arith.constant 1 : index
    %c0_26 = arith.constant 0 : index
    %c0_27 = arith.constant 0 : index
    %103 = vector.load %arg0[%c1, %c0_26, %c0_27] : memref<8x4x192xf32, #tpu.memory_space<vmem>>, vector<1x4x192xf32>
    %104 = vector.shape_cast %103 : vector<1x4x192xf32> to vector<4x192xf32>
    %105 = arith.truncf %94 : vector<4x64xf32> to vector<4x64xbf16>
    %cst_28 = arith.constant dense<0.000000e+00> : vector<4x192xf32>
    %106 = tpu.matmul %105, %0, %cst_28 {dimension_numbers = #tpu.dot_dimension_numbers<[1], [0], [0], [1], [0, 0, 1, 1], [], []>} : vector<4x64xbf16>, vector<64x192xbf16>, vector<4x192xf32> -> vector<4x192xf32>
    %107 = vector.extract_strided_slice %104 {offsets = [0, 0], sizes = [4, 64], strides = [1, 1]} : vector<4x192xf32> to vector<4x64xf32>
    %108 = vector.extract_strided_slice %106 {offsets = [0, 0], sizes = [4, 64], strides = [1, 1]} : vector<4x192xf32> to vector<4x64xf32>
    %109 = arith.addf %107, %108 : vector<4x64xf32>
    %110 = arith.negf %109 : vector<4x64xf32>
    %111 = math.exp %110 : vector<4x64xf32>
    %cst_29 = arith.constant 1.000000e+00 : f32
    %112 = vector.broadcast %cst_29 : f32 to vector<4x64xf32>
    %113 = arith.addf %112, %111 : vector<4x64xf32>
    %114 = arith.divf %112, %113 : vector<4x64xf32>
    %115 = vector.extract_strided_slice %104 {offsets = [0, 64], sizes = [4, 64], strides = [1, 1]} : vector<4x192xf32> to vector<4x64xf32>
    %116 = vector.extract_strided_slice %106 {offsets = [0, 64], sizes = [4, 64], strides = [1, 1]} : vector<4x192xf32> to vector<4x64xf32>
    %117 = arith.addf %115, %116 : vector<4x64xf32>
    %118 = arith.negf %117 : vector<4x64xf32>
    %119 = math.exp %118 : vector<4x64xf32>
    %cst_30 = arith.constant 1.000000e+00 : f32
    %120 = vector.broadcast %cst_30 : f32 to vector<4x64xf32>
    %121 = arith.addf %120, %119 : vector<4x64xf32>
    %122 = arith.divf %120, %121 : vector<4x64xf32>
    %123 = vector.extract_strided_slice %104 {offsets = [0, 128], sizes = [4, 64], strides = [1, 1]} : vector<4x192xf32> to vector<4x64xf32>
    %124 = vector.extract_strided_slice %106 {offsets = [0, 128], sizes = [4, 64], strides = [1, 1]} : vector<4x192xf32> to vector<4x64xf32>
    %125 = arith.addf %124, %3 : vector<4x64xf32>
    %126 = arith.mulf %114, %125 : vector<4x64xf32>
    %127 = arith.addf %123, %126 : vector<4x64xf32>
    %128 = math.tanh %127 : vector<4x64xf32>
    %cst_31 = arith.constant 1.000000e+00 : f32
    %129 = vector.broadcast %cst_31 : f32 to vector<4x64xf32>
    %130 = arith.subf %129, %122 : vector<4x64xf32>
    %131 = arith.mulf %130, %128 : vector<4x64xf32>
    %132 = arith.mulf %122, %94 : vector<4x64xf32>
    %133 = arith.addf %131, %132 : vector<4x64xf32>
    %134 = arith.mulf %21, %133 : vector<4x64xf32>
    %cst_32 = arith.constant 1.000000e+00 : f32
    %135 = vector.broadcast %cst_32 : f32 to vector<4x64xf32>
    %136 = arith.subf %135, %21 : vector<4x64xf32>
    %137 = arith.mulf %136, %94 : vector<4x64xf32>
    %138 = arith.addf %134, %137 : vector<4x64xf32>
    %139 = vector.extract_strided_slice %134 {offsets = [0, 0], sizes = [4, 32], strides = [1, 1]} : vector<4x64xf32> to vector<4x32xf32>
    %140 = vector.extract_strided_slice %134 {offsets = [0, 32], sizes = [4, 32], strides = [1, 1]} : vector<4x64xf32> to vector<4x32xf32>
    %c1_33 = arith.constant 1 : index
    %c0_34 = arith.constant 0 : index
    %c0_35 = arith.constant 0 : index
    %141 = vector.load %arg4[%c1_33, %c0_34, %c0_35] : memref<8x4x32xf32, #tpu.memory_space<vmem>>, vector<1x4x32xf32>
    %142 = vector.shape_cast %141 : vector<1x4x32xf32> to vector<4x32xf32>
    %143 = vector.shape_cast %139 : vector<4x32xf32> to vector<1x4x32xf32>
    tpu.vector_store %arg4[%c1_33, %c0_34, %c0_35], %143 {strides = array<i32>} : memref<8x4x32xf32, #tpu.memory_space<vmem>>, vector<1x4x32xf32>,
    %c6 = arith.constant 6 : index
    %c0_36 = arith.constant 0 : index
    %c0_37 = arith.constant 0 : index
    %144 = vector.load %arg4[%c6, %c0_36, %c0_37] : memref<8x4x32xf32, #tpu.memory_space<vmem>>, vector<1x4x32xf32>
    %145 = vector.shape_cast %144 : vector<1x4x32xf32> to vector<4x32xf32>
    %146 = vector.shape_cast %140 : vector<4x32xf32> to vector<1x4x32xf32>
    tpu.vector_store %arg4[%c6, %c0_36, %c0_37], %146 {strides = array<i32>} : memref<8x4x32xf32, #tpu.memory_space<vmem>>, vector<1x4x32xf32>,
    %c2 = arith.constant 2 : index
    %c0_38 = arith.constant 0 : index
    %c0_39 = arith.constant 0 : index
    %147 = vector.load %arg0[%c2, %c0_38, %c0_39] : memref<8x4x192xf32, #tpu.memory_space<vmem>>, vector<1x4x192xf32>
    %148 = vector.shape_cast %147 : vector<1x4x192xf32> to vector<4x192xf32>
    %149 = arith.truncf %138 : vector<4x64xf32> to vector<4x64xbf16>
    %cst_40 = arith.constant dense<0.000000e+00> : vector<4x192xf32>
    %150 = tpu.matmul %149, %0, %cst_40 {dimension_numbers = #tpu.dot_dimension_numbers<[1], [0], [0], [1], [0, 0, 1, 1], [], []>} : vector<4x64xbf16>, vector<64x192xbf16>, vector<4x192xf32> -> vector<4x192xf32>
    %151 = vector.extract_strided_slice %148 {offsets = [0, 0], sizes = [4, 64], strides = [1, 1]} : vector<4x192xf32> to vector<4x64xf32>
    %152 = vector.extract_strided_slice %150 {offsets = [0, 0], sizes = [4, 64], strides = [1, 1]} : vector<4x192xf32> to vector<4x64xf32>
    %153 = arith.addf %151, %152 : vector<4x64xf32>
    %154 = arith.negf %153 : vector<4x64xf32>
    %155 = math.exp %154 : vector<4x64xf32>
    %cst_41 = arith.constant 1.000000e+00 : f32
    %156 = vector.broadcast %cst_41 : f32 to vector<4x64xf32>
    %157 = arith.addf %156, %155 : vector<4x64xf32>
    %158 = arith.divf %156, %157 : vector<4x64xf32>
    %159 = vector.extract_strided_slice %148 {offsets = [0, 64], sizes = [4, 64], strides = [1, 1]} : vector<4x192xf32> to vector<4x64xf32>
    %160 = vector.extract_strided_slice %150 {offsets = [0, 64], sizes = [4, 64], strides = [1, 1]} : vector<4x192xf32> to vector<4x64xf32>
    %161 = arith.addf %159, %160 : vector<4x64xf32>
    %162 = arith.negf %161 : vector<4x64xf32>
    %163 = math.exp %162 : vector<4x64xf32>
    %cst_42 = arith.constant 1.000000e+00 : f32
    %164 = vector.broadcast %cst_42 : f32 to vector<4x64xf32>
    %165 = arith.addf %164, %163 : vector<4x64xf32>
    %166 = arith.divf %164, %165 : vector<4x64xf32>
    %167 = vector.extract_strided_slice %148 {offsets = [0, 128], sizes = [4, 64], strides = [1, 1]} : vector<4x192xf32> to vector<4x64xf32>
    %168 = vector.extract_strided_slice %150 {offsets = [0, 128], sizes = [4, 64], strides = [1, 1]} : vector<4x192xf32> to vector<4x64xf32>
    %169 = arith.addf %168, %3 : vector<4x64xf32>
    %170 = arith.mulf %158, %169 : vector<4x64xf32>
    %171 = arith.addf %167, %170 : vector<4x64xf32>
    %172 = math.tanh %171 : vector<4x64xf32>
    %cst_43 = arith.constant 1.000000e+00 : f32
    %173 = vector.broadcast %cst_43 : f32 to vector<4x64xf32>
    %174 = arith.subf %173, %166 : vector<4x64xf32>
    %175 = arith.mulf %174, %172 : vector<4x64xf32>
    %176 = arith.mulf %166, %138 : vector<4x64xf32>
    %177 = arith.addf %175, %176 : vector<4x64xf32>
    %178 = arith.mulf %27, %177 : vector<4x64xf32>
    %cst_44 = arith.constant 1.000000e+00 : f32
    %179 = vector.broadcast %cst_44 : f32 to vector<4x64xf32>
    %180 = arith.subf %179, %27 : vector<4x64xf32>
    %181 = arith.mulf %180, %138 : vector<4x64xf32>
    %182 = arith.addf %178, %181 : vector<4x64xf32>
    %183 = vector.extract_strided_slice %178 {offsets = [0, 0], sizes = [4, 32], strides = [1, 1]} : vector<4x64xf32> to vector<4x32xf32>
    %184 = vector.extract_strided_slice %178 {offsets = [0, 32], sizes = [4, 32], strides = [1, 1]} : vector<4x64xf32> to vector<4x32xf32>
    %c2_45 = arith.constant 2 : index
    %c0_46 = arith.constant 0 : index
    %c0_47 = arith.constant 0 : index
    %185 = vector.load %arg4[%c2_45, %c0_46, %c0_47] : memref<8x4x32xf32, #tpu.memory_space<vmem>>, vector<1x4x32xf32>
    %186 = vector.shape_cast %185 : vector<1x4x32xf32> to vector<4x32xf32>
    %187 = vector.shape_cast %183 : vector<4x32xf32> to vector<1x4x32xf32>
    tpu.vector_store %arg4[%c2_45, %c0_46, %c0_47], %187 {strides = array<i32>} : memref<8x4x32xf32, #tpu.memory_space<vmem>>, vector<1x4x32xf32>,
    %c5 = arith.constant 5 : index
    %c0_48 = arith.constant 0 : index
    %c0_49 = arith.constant 0 : index
    %188 = vector.load %arg4[%c5, %c0_48, %c0_49] : memref<8x4x32xf32, #tpu.memory_space<vmem>>, vector<1x4x32xf32>
    %189 = vector.shape_cast %188 : vector<1x4x32xf32> to vector<4x32xf32>
    %190 = vector.shape_cast %184 : vector<4x32xf32> to vector<1x4x32xf32>
    tpu.vector_store %arg4[%c5, %c0_48, %c0_49], %190 {strides = array<i32>} : memref<8x4x32xf32, #tpu.memory_space<vmem>>, vector<1x4x32xf32>,
    %c3 = arith.constant 3 : index
    %c0_50 = arith.constant 0 : index
    %c0_51 = arith.constant 0 : index
    %191 = vector.load %arg0[%c3, %c0_50, %c0_51] : memref<8x4x192xf32, #tpu.memory_space<vmem>>, vector<1x4x192xf32>
    %192 = vector.shape_cast %191 : vector<1x4x192xf32> to vector<4x192xf32>
    %193 = arith.truncf %182 : vector<4x64xf32> to vector<4x64xbf16>
    %cst_52 = arith.constant dense<0.000000e+00> : vector<4x192xf32>
    %194 = tpu.matmul %193, %0, %cst_52 {dimension_numbers = #tpu.dot_dimension_numbers<[1], [0], [0], [1], [0, 0, 1, 1], [], []>} : vector<4x64xbf16>, vector<64x192xbf16>, vector<4x192xf32> -> vector<4x192xf32>
    %195 = vector.extract_strided_slice %192 {offsets = [0, 0], sizes = [4, 64], strides = [1, 1]} : vector<4x192xf32> to vector<4x64xf32>
    %196 = vector.extract_strided_slice %194 {offsets = [0, 0], sizes = [4, 64], strides = [1, 1]} : vector<4x192xf32> to vector<4x64xf32>
    %197 = arith.addf %195, %196 : vector<4x64xf32>
    %198 = arith.negf %197 : vector<4x64xf32>
    %199 = math.exp %198 : vector<4x64xf32>
    %cst_53 = arith.constant 1.000000e+00 : f32
    %200 = vector.broadcast %cst_53 : f32 to vector<4x64xf32>
    %201 = arith.addf %200, %199 : vector<4x64xf32>
    %202 = arith.divf %200, %201 : vector<4x64xf32>
    %203 = vector.extract_strided_slice %192 {offsets = [0, 64], sizes = [4, 64], strides = [1, 1]} : vector<4x192xf32> to vector<4x64xf32>
    %204 = vector.extract_strided_slice %194 {offsets = [0, 64], sizes = [4, 64], strides = [1, 1]} : vector<4x192xf32> to vector<4x64xf32>
    %205 = arith.addf %203, %204 : vector<4x64xf32>
    %206 = arith.negf %205 : vector<4x64xf32>
    %207 = math.exp %206 : vector<4x64xf32>
    %cst_54 = arith.constant 1.000000e+00 : f32
    %208 = vector.broadcast %cst_54 : f32 to vector<4x64xf32>
    %209 = arith.addf %208, %207 : vector<4x64xf32>
    %210 = arith.divf %208, %209 : vector<4x64xf32>
    %211 = vector.extract_strided_slice %192 {offsets = [0, 128], sizes = [4, 64], strides = [1, 1]} : vector<4x192xf32> to vector<4x64xf32>
    %212 = vector.extract_strided_slice %194 {offsets = [0, 128], sizes = [4, 64], strides = [1, 1]} : vector<4x192xf32> to vector<4x64xf32>
    %213 = arith.addf %212, %3 : vector<4x64xf32>
    %214 = arith.mulf %202, %213 : vector<4x64xf32>
    %215 = arith.addf %211, %214 : vector<4x64xf32>
    %216 = math.tanh %215 : vector<4x64xf32>
    %cst_55 = arith.constant 1.000000e+00 : f32
    %217 = vector.broadcast %cst_55 : f32 to vector<4x64xf32>
    %218 = arith.subf %217, %210 : vector<4x64xf32>
    %219 = arith.mulf %218, %216 : vector<4x64xf32>
    %220 = arith.mulf %210, %182 : vector<4x64xf32>
    %221 = arith.addf %219, %220 : vector<4x64xf32>
    %222 = arith.mulf %33, %221 : vector<4x64xf32>
    %cst_56 = arith.constant 1.000000e+00 : f32
    %223 = vector.broadcast %cst_56 : f32 to vector<4x64xf32>
    %224 = arith.subf %223, %33 : vector<4x64xf32>
    %225 = arith.mulf %224, %182 : vector<4x64xf32>
    %226 = arith.addf %222, %225 : vector<4x64xf32>
    %227 = vector.extract_strided_slice %222 {offsets = [0, 0], sizes = [4, 32], strides = [1, 1]} : vector<4x64xf32> to vector<4x32xf32>
    %228 = vector.extract_strided_slice %222 {offsets = [0, 32], sizes = [4, 32], strides = [1, 1]} : vector<4x64xf32> to vector<4x32xf32>
    %c3_57 = arith.constant 3 : index
    %c0_58 = arith.constant 0 : index
    %c0_59 = arith.constant 0 : index
    %229 = vector.load %arg4[%c3_57, %c0_58, %c0_59] : memref<8x4x32xf32, #tpu.memory_space<vmem>>, vector<1x4x32xf32>
    %230 = vector.shape_cast %229 : vector<1x4x32xf32> to vector<4x32xf32>
    %231 = vector.shape_cast %227 : vector<4x32xf32> to vector<1x4x32xf32>
    tpu.vector_store %arg4[%c3_57, %c0_58, %c0_59], %231 {strides = array<i32>} : memref<8x4x32xf32, #tpu.memory_space<vmem>>, vector<1x4x32xf32>,
    %c4 = arith.constant 4 : index
    %c0_60 = arith.constant 0 : index
    %c0_61 = arith.constant 0 : index
    %232 = vector.load %arg4[%c4, %c0_60, %c0_61] : memref<8x4x32xf32, #tpu.memory_space<vmem>>, vector<1x4x32xf32>
    %233 = vector.shape_cast %232 : vector<1x4x32xf32> to vector<4x32xf32>
    %234 = vector.shape_cast %228 : vector<4x32xf32> to vector<1x4x32xf32>
    tpu.vector_store %arg4[%c4, %c0_60, %c0_61], %234 {strides = array<i32>} : memref<8x4x32xf32, #tpu.memory_space<vmem>>, vector<1x4x32xf32>,
    %c4_62 = arith.constant 4 : index
    %c0_63 = arith.constant 0 : index
    %c0_64 = arith.constant 0 : index
    %235 = vector.load %arg0[%c4_62, %c0_63, %c0_64] : memref<8x4x192xf32, #tpu.memory_space<vmem>>, vector<1x4x192xf32>
    %236 = vector.shape_cast %235 : vector<1x4x192xf32> to vector<4x192xf32>
    %237 = arith.truncf %226 : vector<4x64xf32> to vector<4x64xbf16>
    %cst_65 = arith.constant dense<0.000000e+00> : vector<4x192xf32>
    %238 = tpu.matmul %237, %0, %cst_65 {dimension_numbers = #tpu.dot_dimension_numbers<[1], [0], [0], [1], [0, 0, 1, 1], [], []>} : vector<4x64xbf16>, vector<64x192xbf16>, vector<4x192xf32> -> vector<4x192xf32>
    %239 = vector.extract_strided_slice %236 {offsets = [0, 0], sizes = [4, 64], strides = [1, 1]} : vector<4x192xf32> to vector<4x64xf32>
    %240 = vector.extract_strided_slice %238 {offsets = [0, 0], sizes = [4, 64], strides = [1, 1]} : vector<4x192xf32> to vector<4x64xf32>
    %241 = arith.addf %239, %240 : vector<4x64xf32>
    %242 = arith.negf %241 : vector<4x64xf32>
    %243 = math.exp %242 : vector<4x64xf32>
    %cst_66 = arith.constant 1.000000e+00 : f32
    %244 = vector.broadcast %cst_66 : f32 to vector<4x64xf32>
    %245 = arith.addf %244, %243 : vector<4x64xf32>
    %246 = arith.divf %244, %245 : vector<4x64xf32>
    %247 = vector.extract_strided_slice %236 {offsets = [0, 64], sizes = [4, 64], strides = [1, 1]} : vector<4x192xf32> to vector<4x64xf32>
    %248 = vector.extract_strided_slice %238 {offsets = [0, 64], sizes = [4, 64], strides = [1, 1]} : vector<4x192xf32> to vector<4x64xf32>
    %249 = arith.addf %247, %248 : vector<4x64xf32>
    %250 = arith.negf %249 : vector<4x64xf32>
    %251 = math.exp %250 : vector<4x64xf32>
    %cst_67 = arith.constant 1.000000e+00 : f32
    %252 = vector.broadcast %cst_67 : f32 to vector<4x64xf32>
    %253 = arith.addf %252, %251 : vector<4x64xf32>
    %254 = arith.divf %252, %253 : vector<4x64xf32>
    %255 = vector.extract_strided_slice %236 {offsets = [0, 128], sizes = [4, 64], strides = [1, 1]} : vector<4x192xf32> to vector<4x64xf32>
    %256 = vector.extract_strided_slice %238 {offsets = [0, 128], sizes = [4, 64], strides = [1, 1]} : vector<4x192xf32> to vector<4x64xf32>
    %257 = arith.addf %256, %3 : vector<4x64xf32>
    %258 = arith.mulf %246, %257 : vector<4x64xf32>
    %259 = arith.addf %255, %258 : vector<4x64xf32>
    %260 = math.tanh %259 : vector<4x64xf32>
    %cst_68 = arith.constant 1.000000e+00 : f32
    %261 = vector.broadcast %cst_68 : f32 to vector<4x64xf32>
    %262 = arith.subf %261, %254 : vector<4x64xf32>
    %263 = arith.mulf %262, %260 : vector<4x64xf32>
    %264 = arith.mulf %254, %226 : vector<4x64xf32>
    %265 = arith.addf %263, %264 : vector<4x64xf32>
    %266 = arith.mulf %39, %265 : vector<4x64xf32>
    %cst_69 = arith.constant 1.000000e+00 : f32
    %267 = vector.broadcast %cst_69 : f32 to vector<4x64xf32>
    %268 = arith.subf %267, %39 : vector<4x64xf32>
    %269 = arith.mulf %268, %226 : vector<4x64xf32>
    %270 = arith.addf %266, %269 : vector<4x64xf32>
    %271 = vector.extract_strided_slice %266 {offsets = [0, 0], sizes = [4, 32], strides = [1, 1]} : vector<4x64xf32> to vector<4x32xf32>
    %272 = vector.extract_strided_slice %266 {offsets = [0, 32], sizes = [4, 32], strides = [1, 1]} : vector<4x64xf32> to vector<4x32xf32>
    %c4_70 = arith.constant 4 : index
    %c0_71 = arith.constant 0 : index
    %c0_72 = arith.constant 0 : index
    %273 = vector.load %arg4[%c4_70, %c0_71, %c0_72] : memref<8x4x32xf32, #tpu.memory_space<vmem>>, vector<1x4x32xf32>
    %274 = vector.shape_cast %273 : vector<1x4x32xf32> to vector<4x32xf32>
    %275 = arith.addf %274, %271 : vector<4x32xf32>
    %c4_73 = arith.constant 4 : index
    %c0_74 = arith.constant 0 : index
    %c0_75 = arith.constant 0 : index
    %276 = vector.load %arg4[%c4_73, %c0_74, %c0_75] : memref<8x4x32xf32, #tpu.memory_space<vmem>>, vector<1x4x32xf32>
    %277 = vector.shape_cast %276 : vector<1x4x32xf32> to vector<4x32xf32>
    %278 = vector.shape_cast %275 : vector<4x32xf32> to vector<1x4x32xf32>
    tpu.vector_store %arg4[%c4_73, %c0_74, %c0_75], %278 {strides = array<i32>} : memref<8x4x32xf32, #tpu.memory_space<vmem>>, vector<1x4x32xf32>,
    %c3_76 = arith.constant 3 : index
    %c0_77 = arith.constant 0 : index
    %c0_78 = arith.constant 0 : index
    %279 = vector.load %arg4[%c3_76, %c0_77, %c0_78] : memref<8x4x32xf32, #tpu.memory_space<vmem>>, vector<1x4x32xf32>
    %280 = vector.shape_cast %279 : vector<1x4x32xf32> to vector<4x32xf32>
    %281 = arith.addf %280, %272 : vector<4x32xf32>
    %c3_79 = arith.constant 3 : index
    %c0_80 = arith.constant 0 : index
    %c0_81 = arith.constant 0 : index
    %282 = vector.load %arg4[%c3_79, %c0_80, %c0_81] : memref<8x4x32xf32, #tpu.memory_space<vmem>>, vector<1x4x32xf32>
    %283 = vector.shape_cast %282 : vector<1x4x32xf32> to vector<4x32xf32>
    %284 = vector.shape_cast %281 : vector<4x32xf32> to vector<1x4x32xf32>
    tpu.vector_store %arg4[%c3_79, %c0_80, %c0_81], %284 {strides = array<i32>} : memref<8x4x32xf32, #tpu.memory_space<vmem>>, vector<1x4x32xf32>,
    %c5_82 = arith.constant 5 : index
    %c0_83 = arith.constant 0 : index
    %c0_84 = arith.constant 0 : index
    %285 = vector.load %arg0[%c5_82, %c0_83, %c0_84] : memref<8x4x192xf32, #tpu.memory_space<vmem>>, vector<1x4x192xf32>
    %286 = vector.shape_cast %285 : vector<1x4x192xf32> to vector<4x192xf32>
    %287 = arith.truncf %270 : vector<4x64xf32> to vector<4x64xbf16>
    %cst_85 = arith.constant dense<0.000000e+00> : vector<4x192xf32>
    %288 = tpu.matmul %287, %0, %cst_85 {dimension_numbers = #tpu.dot_dimension_numbers<[1], [0], [0], [1], [0, 0, 1, 1], [], []>} : vector<4x64xbf16>, vector<64x192xbf16>, vector<4x192xf32> -> vector<4x192xf32>
    %289 = vector.extract_strided_slice %286 {offsets = [0, 0], sizes = [4, 64], strides = [1, 1]} : vector<4x192xf32> to vector<4x64xf32>
    %290 = vector.extract_strided_slice %288 {offsets = [0, 0], sizes = [4, 64], strides = [1, 1]} : vector<4x192xf32> to vector<4x64xf32>
    %291 = arith.addf %289, %290 : vector<4x64xf32>
    %292 = arith.negf %291 : vector<4x64xf32>
    %293 = math.exp %292 : vector<4x64xf32>
    %cst_86 = arith.constant 1.000000e+00 : f32
    %294 = vector.broadcast %cst_86 : f32 to vector<4x64xf32>
    %295 = arith.addf %294, %293 : vector<4x64xf32>
    %296 = arith.divf %294, %295 : vector<4x64xf32>
    %297 = vector.extract_strided_slice %286 {offsets = [0, 64], sizes = [4, 64], strides = [1, 1]} : vector<4x192xf32> to vector<4x64xf32>
    %298 = vector.extract_strided_slice %288 {offsets = [0, 64], sizes = [4, 64], strides = [1, 1]} : vector<4x192xf32> to vector<4x64xf32>
    %299 = arith.addf %297, %298 : vector<4x64xf32>
    %300 = arith.negf %299 : vector<4x64xf32>
    %301 = math.exp %300 : vector<4x64xf32>
    %cst_87 = arith.constant 1.000000e+00 : f32
    %302 = vector.broadcast %cst_87 : f32 to vector<4x64xf32>
    %303 = arith.addf %302, %301 : vector<4x64xf32>
    %304 = arith.divf %302, %303 : vector<4x64xf32>
    %305 = vector.extract_strided_slice %286 {offsets = [0, 128], sizes = [4, 64], strides = [1, 1]} : vector<4x192xf32> to vector<4x64xf32>
    %306 = vector.extract_strided_slice %288 {offsets = [0, 128], sizes = [4, 64], strides = [1, 1]} : vector<4x192xf32> to vector<4x64xf32>
    %307 = arith.addf %306, %3 : vector<4x64xf32>
    %308 = arith.mulf %296, %307 : vector<4x64xf32>
    %309 = arith.addf %305, %308 : vector<4x64xf32>
    %310 = math.tanh %309 : vector<4x64xf32>
    %cst_88 = arith.constant 1.000000e+00 : f32
    %311 = vector.broadcast %cst_88 : f32 to vector<4x64xf32>
    %312 = arith.subf %311, %304 : vector<4x64xf32>
    %313 = arith.mulf %312, %310 : vector<4x64xf32>
    %314 = arith.mulf %304, %270 : vector<4x64xf32>
    %315 = arith.addf %313, %314 : vector<4x64xf32>
    %316 = arith.mulf %45, %315 : vector<4x64xf32>
    %cst_89 = arith.constant 1.000000e+00 : f32
    %317 = vector.broadcast %cst_89 : f32 to vector<4x64xf32>
    %318 = arith.subf %317, %45 : vector<4x64xf32>
    %319 = arith.mulf %318, %270 : vector<4x64xf32>
    %320 = arith.addf %316, %319 : vector<4x64xf32>
    %321 = vector.extract_strided_slice %316 {offsets = [0, 0], sizes = [4, 32], strides = [1, 1]} : vector<4x64xf32> to vector<4x32xf32>
    %322 = vector.extract_strided_slice %316 {offsets = [0, 32], sizes = [4, 32], strides = [1, 1]} : vector<4x64xf32> to vector<4x32xf32>
    %c5_90 = arith.constant 5 : index
    %c0_91 = arith.constant 0 : index
    %c0_92 = arith.constant 0 : index
    %323 = vector.load %arg4[%c5_90, %c0_91, %c0_92] : memref<8x4x32xf32, #tpu.memory_space<vmem>>, vector<1x4x32xf32>
    %324 = vector.shape_cast %323 : vector<1x4x32xf32> to vector<4x32xf32>
    %325 = arith.addf %324, %321 : vector<4x32xf32>
    %c5_93 = arith.constant 5 : index
    %c0_94 = arith.constant 0 : index
    %c0_95 = arith.constant 0 : index
    %326 = vector.load %arg4[%c5_93, %c0_94, %c0_95] : memref<8x4x32xf32, #tpu.memory_space<vmem>>, vector<1x4x32xf32>
    %327 = vector.shape_cast %326 : vector<1x4x32xf32> to vector<4x32xf32>
    %328 = vector.shape_cast %325 : vector<4x32xf32> to vector<1x4x32xf32>
    tpu.vector_store %arg4[%c5_93, %c0_94, %c0_95], %328 {strides = array<i32>} : memref<8x4x32xf32, #tpu.memory_space<vmem>>, vector<1x4x32xf32>,
    %c2_96 = arith.constant 2 : index
    %c0_97 = arith.constant 0 : index
    %c0_98 = arith.constant 0 : index
    %329 = vector.load %arg4[%c2_96, %c0_97, %c0_98] : memref<8x4x32xf32, #tpu.memory_space<vmem>>, vector<1x4x32xf32>
    %330 = vector.shape_cast %329 : vector<1x4x32xf32> to vector<4x32xf32>
    %331 = arith.addf %330, %322 : vector<4x32xf32>
    %c2_99 = arith.constant 2 : index
    %c0_100 = arith.constant 0 : index
    %c0_101 = arith.constant 0 : index
    %332 = vector.load %arg4[%c2_99, %c0_100, %c0_101] : memref<8x4x32xf32, #tpu.memory_space<vmem>>, vector<1x4x32xf32>
    %333 = vector.shape_cast %332 : vector<1x4x32xf32> to vector<4x32xf32>
    %334 = vector.shape_cast %331 : vector<4x32xf32> to vector<1x4x32xf32>
    tpu.vector_store %arg4[%c2_99, %c0_100, %c0_101], %334 {strides = array<i32>} : memref<8x4x32xf32, #tpu.memory_space<vmem>>, vector<1x4x32xf32>,
    %c6_102 = arith.constant 6 : index
    %c0_103 = arith.constant 0 : index
    %c0_104 = arith.constant 0 : index
    %335 = vector.load %arg0[%c6_102, %c0_103, %c0_104] : memref<8x4x192xf32, #tpu.memory_space<vmem>>, vector<1x4x192xf32>
    %336 = vector.shape_cast %335 : vector<1x4x192xf32> to vector<4x192xf32>
    %337 = arith.truncf %320 : vector<4x64xf32> to vector<4x64xbf16>
    %cst_105 = arith.constant dense<0.000000e+00> : vector<4x192xf32>
    %338 = tpu.matmul %337, %0, %cst_105 {dimension_numbers = #tpu.dot_dimension_numbers<[1], [0], [0], [1], [0, 0, 1, 1], [], []>} : vector<4x64xbf16>, vector<64x192xbf16>, vector<4x192xf32> -> vector<4x192xf32>
    %339 = vector.extract_strided_slice %336 {offsets = [0, 0], sizes = [4, 64], strides = [1, 1]} : vector<4x192xf32> to vector<4x64xf32>
    %340 = vector.extract_strided_slice %338 {offsets = [0, 0], sizes = [4, 64], strides = [1, 1]} : vector<4x192xf32> to vector<4x64xf32>
    %341 = arith.addf %339, %340 : vector<4x64xf32>
    %342 = arith.negf %341 : vector<4x64xf32>
    %343 = math.exp %342 : vector<4x64xf32>
    %cst_106 = arith.constant 1.000000e+00 : f32
    %344 = vector.broadcast %cst_106 : f32 to vector<4x64xf32>
    %345 = arith.addf %344, %343 : vector<4x64xf32>
    %346 = arith.divf %344, %345 : vector<4x64xf32>
    %347 = vector.extract_strided_slice %336 {offsets = [0, 64], sizes = [4, 64], strides = [1, 1]} : vector<4x192xf32> to vector<4x64xf32>
    %348 = vector.extract_strided_slice %338 {offsets = [0, 64], sizes = [4, 64], strides = [1, 1]} : vector<4x192xf32> to vector<4x64xf32>
    %349 = arith.addf %347, %348 : vector<4x64xf32>
    %350 = arith.negf %349 : vector<4x64xf32>
    %351 = math.exp %350 : vector<4x64xf32>
    %cst_107 = arith.constant 1.000000e+00 : f32
    %352 = vector.broadcast %cst_107 : f32 to vector<4x64xf32>
    %353 = arith.addf %352, %351 : vector<4x64xf32>
    %354 = arith.divf %352, %353 : vector<4x64xf32>
    %355 = vector.extract_strided_slice %336 {offsets = [0, 128], sizes = [4, 64], strides = [1, 1]} : vector<4x192xf32> to vector<4x64xf32>
    %356 = vector.extract_strided_slice %338 {offsets = [0, 128], sizes = [4, 64], strides = [1, 1]} : vector<4x192xf32> to vector<4x64xf32>
    %357 = arith.addf %356, %3 : vector<4x64xf32>
    %358 = arith.mulf %346, %357 : vector<4x64xf32>
    %359 = arith.addf %355, %358 : vector<4x64xf32>
    %360 = math.tanh %359 : vector<4x64xf32>
    %cst_108 = arith.constant 1.000000e+00 : f32
    %361 = vector.broadcast %cst_108 : f32 to vector<4x64xf32>
    %362 = arith.subf %361, %354 : vector<4x64xf32>
    %363 = arith.mulf %362, %360 : vector<4x64xf32>
    %364 = arith.mulf %354, %320 : vector<4x64xf32>
    %365 = arith.addf %363, %364 : vector<4x64xf32>
    %366 = arith.mulf %51, %365 : vector<4x64xf32>
    %cst_109 = arith.constant 1.000000e+00 : f32
    %367 = vector.broadcast %cst_109 : f32 to vector<4x64xf32>
    %368 = arith.subf %367, %51 : vector<4x64xf32>
    %369 = arith.mulf %368, %320 : vector<4x64xf32>
    %370 = arith.addf %366, %369 : vector<4x64xf32>
    %371 = vector.extract_strided_slice %366 {offsets = [0, 0], sizes = [4, 32], strides = [1, 1]} : vector<4x64xf32> to vector<4x32xf32>
    %372 = vector.extract_strided_slice %366 {offsets = [0, 32], sizes = [4, 32], strides = [1, 1]} : vector<4x64xf32> to vector<4x32xf32>
    %c6_110 = arith.constant 6 : index
    %c0_111 = arith.constant 0 : index
    %c0_112 = arith.constant 0 : index
    %373 = vector.load %arg4[%c6_110, %c0_111, %c0_112] : memref<8x4x32xf32, #tpu.memory_space<vmem>>, vector<1x4x32xf32>
    %374 = vector.shape_cast %373 : vector<1x4x32xf32> to vector<4x32xf32>
    %375 = arith.addf %374, %371 : vector<4x32xf32>
    %c6_113 = arith.constant 6 : index
    %c0_114 = arith.constant 0 : index
    %c0_115 = arith.constant 0 : index
    %376 = vector.load %arg4[%c6_113, %c0_114, %c0_115] : memref<8x4x32xf32, #tpu.memory_space<vmem>>, vector<1x4x32xf32>
    %377 = vector.shape_cast %376 : vector<1x4x32xf32> to vector<4x32xf32>
    %378 = vector.shape_cast %375 : vector<4x32xf32> to vector<1x4x32xf32>
    tpu.vector_store %arg4[%c6_113, %c0_114, %c0_115], %378 {strides = array<i32>} : memref<8x4x32xf32, #tpu.memory_space<vmem>>, vector<1x4x32xf32>,
    %c1_116 = arith.constant 1 : index
    %c0_117 = arith.constant 0 : index
    %c0_118 = arith.constant 0 : index
    %379 = vector.load %arg4[%c1_116, %c0_117, %c0_118] : memref<8x4x32xf32, #tpu.memory_space<vmem>>, vector<1x4x32xf32>
    %380 = vector.shape_cast %379 : vector<1x4x32xf32> to vector<4x32xf32>
    %381 = arith.addf %380, %372 : vector<4x32xf32>
    %c1_119 = arith.constant 1 : index
    %c0_120 = arith.constant 0 : index
    %c0_121 = arith.constant 0 : index
    %382 = vector.load %arg4[%c1_119, %c0_120, %c0_121] : memref<8x4x32xf32, #tpu.memory_space<vmem>>, vector<1x4x32xf32>
    %383 = vector.shape_cast %382 : vector<1x4x32xf32> to vector<4x32xf32>
    %384 = vector.shape_cast %381 : vector<4x32xf32> to vector<1x4x32xf32>
    tpu.vector_store %arg4[%c1_119, %c0_120, %c0_121], %384 {strides = array<i32>} : memref<8x4x32xf32, #tpu.memory_space<vmem>>, vector<1x4x32xf32>,
    %c7_122 = arith.constant 7 : index
    %c0_123 = arith.constant 0 : index
    %c0_124 = arith.constant 0 : index
    %385 = vector.load %arg0[%c7_122, %c0_123, %c0_124] : memref<8x4x192xf32, #tpu.memory_space<vmem>>, vector<1x4x192xf32>
    %386 = vector.shape_cast %385 : vector<1x4x192xf32> to vector<4x192xf32>
    %387 = arith.truncf %370 : vector<4x64xf32> to vector<4x64xbf16>
    %cst_125 = arith.constant dense<0.000000e+00> : vector<4x192xf32>
    %388 = tpu.matmul %387, %0, %cst_125 {dimension_numbers = #tpu.dot_dimension_numbers<[1], [0], [0], [1], [0, 0, 1, 1], [], []>} : vector<4x64xbf16>, vector<64x192xbf16>, vector<4x192xf32> -> vector<4x192xf32>
    %389 = vector.extract_strided_slice %386 {offsets = [0, 0], sizes = [4, 64], strides = [1, 1]} : vector<4x192xf32> to vector<4x64xf32>
    %390 = vector.extract_strided_slice %388 {offsets = [0, 0], sizes = [4, 64], strides = [1, 1]} : vector<4x192xf32> to vector<4x64xf32>
    %391 = arith.addf %389, %390 : vector<4x64xf32>
    %392 = arith.negf %391 : vector<4x64xf32>
    %393 = math.exp %392 : vector<4x64xf32>
    %cst_126 = arith.constant 1.000000e+00 : f32
    %394 = vector.broadcast %cst_126 : f32 to vector<4x64xf32>
    %395 = arith.addf %394, %393 : vector<4x64xf32>
    %396 = arith.divf %394, %395 : vector<4x64xf32>
    %397 = vector.extract_strided_slice %386 {offsets = [0, 64], sizes = [4, 64], strides = [1, 1]} : vector<4x192xf32> to vector<4x64xf32>
    %398 = vector.extract_strided_slice %388 {offsets = [0, 64], sizes = [4, 64], strides = [1, 1]} : vector<4x192xf32> to vector<4x64xf32>
    %399 = arith.addf %397, %398 : vector<4x64xf32>
    %400 = arith.negf %399 : vector<4x64xf32>
    %401 = math.exp %400 : vector<4x64xf32>
    %cst_127 = arith.constant 1.000000e+00 : f32
    %402 = vector.broadcast %cst_127 : f32 to vector<4x64xf32>
    %403 = arith.addf %402, %401 : vector<4x64xf32>
    %404 = arith.divf %402, %403 : vector<4x64xf32>
    %405 = vector.extract_strided_slice %386 {offsets = [0, 128], sizes = [4, 64], strides = [1, 1]} : vector<4x192xf32> to vector<4x64xf32>
    %406 = vector.extract_strided_slice %388 {offsets = [0, 128], sizes = [4, 64], strides = [1, 1]} : vector<4x192xf32> to vector<4x64xf32>
    %407 = arith.addf %406, %3 : vector<4x64xf32>
    %408 = arith.mulf %396, %407 : vector<4x64xf32>
    %409 = arith.addf %405, %408 : vector<4x64xf32>
    %410 = math.tanh %409 : vector<4x64xf32>
    %cst_128 = arith.constant 1.000000e+00 : f32
    %411 = vector.broadcast %cst_128 : f32 to vector<4x64xf32>
    %412 = arith.subf %411, %404 : vector<4x64xf32>
    %413 = arith.mulf %412, %410 : vector<4x64xf32>
    %414 = arith.mulf %404, %370 : vector<4x64xf32>
    %415 = arith.addf %413, %414 : vector<4x64xf32>
    %416 = arith.mulf %57, %415 : vector<4x64xf32>
    %cst_129 = arith.constant 1.000000e+00 : f32
    %417 = vector.broadcast %cst_129 : f32 to vector<4x64xf32>
    %418 = arith.subf %417, %57 : vector<4x64xf32>
    %419 = arith.mulf %418, %370 : vector<4x64xf32>
    %420 = arith.addf %416, %419 : vector<4x64xf32>
    %421 = vector.extract_strided_slice %416 {offsets = [0, 0], sizes = [4, 32], strides = [1, 1]} : vector<4x64xf32> to vector<4x32xf32>
    %422 = vector.extract_strided_slice %416 {offsets = [0, 32], sizes = [4, 32], strides = [1, 1]} : vector<4x64xf32> to vector<4x32xf32>
    %c7_130 = arith.constant 7 : index
    %c0_131 = arith.constant 0 : index
    %c0_132 = arith.constant 0 : index
    %423 = vector.load %arg4[%c7_130, %c0_131, %c0_132] : memref<8x4x32xf32, #tpu.memory_space<vmem>>, vector<1x4x32xf32>
    %424 = vector.shape_cast %423 : vector<1x4x32xf32> to vector<4x32xf32>
    %425 = arith.addf %424, %421 : vector<4x32xf32>
    %c7_133 = arith.constant 7 : index
    %c0_134 = arith.constant 0 : index
    %c0_135 = arith.constant 0 : index
    %426 = vector.load %arg4[%c7_133, %c0_134, %c0_135] : memref<8x4x32xf32, #tpu.memory_space<vmem>>, vector<1x4x32xf32>
    %427 = vector.shape_cast %426 : vector<1x4x32xf32> to vector<4x32xf32>
    %428 = vector.shape_cast %425 : vector<4x32xf32> to vector<1x4x32xf32>
    tpu.vector_store %arg4[%c7_133, %c0_134, %c0_135], %428 {strides = array<i32>} : memref<8x4x32xf32, #tpu.memory_space<vmem>>, vector<1x4x32xf32>,
    %c0_136 = arith.constant 0 : index
    %c0_137 = arith.constant 0 : index
    %c0_138 = arith.constant 0 : index
    %429 = vector.load %arg4[%c0_136, %c0_137, %c0_138] : memref<8x4x32xf32, #tpu.memory_space<vmem>>, vector<1x4x32xf32>
    %430 = vector.shape_cast %429 : vector<1x4x32xf32> to vector<4x32xf32>
    %431 = arith.addf %430, %422 : vector<4x32xf32>
    %c0_139 = arith.constant 0 : index
    %c0_140 = arith.constant 0 : index
    %c0_141 = arith.constant 0 : index
    %432 = vector.load %arg4[%c0_139, %c0_140, %c0_141] : memref<8x4x32xf32, #tpu.memory_space<vmem>>, vector<1x4x32xf32>
    %433 = vector.shape_cast %432 : vector<1x4x32xf32> to vector<4x32xf32>
    %434 = vector.shape_cast %431 : vector<4x32xf32> to vector<1x4x32xf32>
    tpu.vector_store %arg4[%c0_139, %c0_140, %c0_141], %434 {strides = array<i32>} : memref<8x4x32xf32, #tpu.memory_space<vmem>>, vector<1x4x32xf32>,
    %435 = vector.extract_strided_slice %420 {offsets = [0, 0], sizes = [4, 32], strides = [1, 1]} : vector<4x64xf32> to vector<4x32xf32>
    %c0_142 = arith.constant 0 : index
    %c0_143 = arith.constant 0 : index
    %c0_144 = arith.constant 0 : index
    %436 = vector.load %arg5[%c0_142, %c0_143, %c0_144] : memref<2x4x32xf32, #tpu.memory_space<vmem>>, vector<1x4x32xf32>
    %437 = vector.shape_cast %436 : vector<1x4x32xf32> to vector<4x32xf32>
    %438 = vector.shape_cast %435 : vector<4x32xf32> to vector<1x4x32xf32>
    tpu.vector_store %arg5[%c0_142, %c0_143, %c0_144], %438 {strides = array<i32>} : memref<2x4x32xf32, #tpu.memory_space<vmem>>, vector<1x4x32xf32>,
    %439 = vector.extract_strided_slice %420 {offsets = [0, 32], sizes = [4, 32], strides = [1, 1]} : vector<4x64xf32> to vector<4x32xf32>
    %c1_145 = arith.constant 1 : index
    %c0_146 = arith.constant 0 : index
    %c0_147 = arith.constant 0 : index
    %440 = vector.load %arg5[%c1_145, %c0_146, %c0_147] : memref<2x4x32xf32, #tpu.memory_space<vmem>>, vector<1x4x32xf32>
    %441 = vector.shape_cast %440 : vector<1x4x32xf32> to vector<4x32xf32>
    %442 = vector.shape_cast %439 : vector<4x32xf32> to vector<1x4x32xf32>
    tpu.vector_store %arg5[%c1_145, %c0_146, %c0_147], %442 {strides = array<i32>} : memref<2x4x32xf32, #tpu.memory_space<vmem>>, vector<1x4x32xf32>,
    return
  }
}

</mosaic_0001>

<llo_original>
// kernel: encoder_rnn_forward.1
$region0: #{encoder_rnn_forward.1}
  #allocation0 [shape = 'u32[]', space=smem, size = 0x4, offset = 0x4, fixed_abs, tag = 'smem constant byte address 0x4 - core index']
  #allocation1 [shape = 'u32[144,128]{1,0:T(1,128)}', space=vmem, size = 0x12000, scoped, tag = 'internal scratch']
  %s0 = inlined_call_operand.vmem [shape: f32[8,4,192], index: 0, kind: input, shape index: {}]
  %s1 = inlined_call_operand.vmem [shape: s32[4,1], index: 1, kind: input, shape index: {}]
  %s2 = inlined_call_operand.vmem [shape: bf16[64,192], index: 2, kind: input, shape index: {}]
  %s3 = inlined_call_operand.vmem [shape: f32[1,64], index: 3, kind: input, shape index: {}]
  %s4 = inlined_call_operand.hbm [shape: f32[8,4,32], index: 4, kind: output, shape index: {0}]
  %s5 = inlined_call_operand.hbm [shape: f32[2,4,32], index: 5, kind: output, shape index: {1}]
  %6 = xla_tuple %s4, %s5
  %s7 = sld [smem:[#allocation0]]
  $region34: #{encoder_rnn_forward.1} parent=0
    _
  %s9 = ssub.s32 1, %s7
  %s10 = scalar_select 0, %s9, %s7
  $region1: #{encoder_rnn_forward.1} parent=0
    #allocation2 [shape = 'u8[16384]{0}', space=vmem, size = 0x4000, scoped, tag = 'output window, operand 0, single buffered']
    #allocation3 [shape = 's32[1]{0}', space=sflag, size = 0x4, scoped, tag = 'scoped memory for encoder_rnn_forward.1']
    #allocation4 [shape = 'u8[4096]{0}', space=vmem, size = 0x1000, scoped, tag = 'output window, operand 1, single buffered']
    #allocation5 [shape = 's32[1]{0}', space=sflag, size = 0x4, scoped, tag = 'scoped memory for encoder_rnn_forward.1']
    %11 = vsyncpa [#allocation3], 0
    %12 = vsyncpa [#allocation5], 0
    // Predicated region
    $region2: #{encoder_rnn_forward.1} parent=1 // pred_check
      _
    $region3: #{encoder_rnn_forward.1} parent=1 // pred_check_branch
      %14 = sbr.rel (0) target = $region5
    $region4: #{encoder_rnn_forward.1} parent=1 // pred_region
      _
    $region5: #{encoder_rnn_forward.1} parent=1 // pred_fallthru
      _
    // Predicated region
    $region6: #{encoder_rnn_forward.1} parent=1 // pred_check
      _
    $region7: #{encoder_rnn_forward.1} parent=1 // pred_check_branch
      %16 = sbr.rel (0) target = $region9
    $region8: #{encoder_rnn_forward.1} parent=1 // pred_region
      _
    $region9: #{encoder_rnn_forward.1} parent=1 // pred_fallthru
      _
    // Predicated region
    $region10: #{encoder_rnn_forward.1} parent=1 // pred_check
      _
    $region11: #{encoder_rnn_forward.1} parent=1 // pred_check_branch
      %18 = sbr.rel (0) target = $region13
    $region12: #{encoder_rnn_forward.1} parent=1 // pred_region
      _
    $region13: #{encoder_rnn_forward.1} parent=1 // pred_fallthru
      _
    // Predicated region
    $region14: #{encoder_rnn_forward.1} parent=1 // pred_check
      _
    $region15: #{encoder_rnn_forward.1} parent=1 // pred_check_branch
      %20 = sbr.rel (0) target = $region17
    $region16: #{encoder_rnn_forward.1} parent=1 // pred_region
      _
    $region17: #{encoder_rnn_forward.1} parent=1 // pred_fallthru
      _
    %v22 = vld [vmem:[%s2] sm:$0xff]
    %v23 = vld [vmem:[%s2 + $0x8] sm:$0xff]
    %v24 = vld [vmem:[%s2 + $0x10] sm:$0xff]
    %v25 = vld [vmem:[%s2 + $0x18] sm:$0xff]
    %v26 = vld [vmem:[%s2 + $0x20] sm:$0xff]
    %v27 = vld [vmem:[%s2 + $0x28] sm:$0xff]
    %v28 = vld [vmem:[%s2 + $0x30] sm:$0xff]
    %v29 = vld [vmem:[%s2 + $0x38] sm:$0xff]
    %v30 = vld [vmem:[%s3] sm:$0x1]
    %v32 = vlaneseq
    %v33 = vshrl.u32 %v32, 7
    %v34 = vsub.s32 0, %v33
    %v35 = vrot.slane %v30, %v34
    %v37 = vld [vmem:[%s1] sm:$0xf]
    %38 = vset.pattern.permute.xlu0 0
    %39 = vperm.xlu0 %38, %v37
    %v40 = vpop.permute.xlu0 %39
    %v41 = vlaneseq
    %v42 = vand.u32 %v41, 127
    %vm43 = vcmp.lt.s32.totalorder %v42, 32
    %v44 = vsel %vm43, 0, 7
    %vm45 = vcmp.gt.s32.totalorder %v40, %v44
    %v46 = vsel %vm45, 1, 0
    %v47 = vcvt.s32.f32 %v46
    %v48 = vsel %vm43, 1, 6
    %vm49 = vcmp.gt.s32.totalorder %v40, %v48
    %v50 = vsel %vm49, 1, 0
    %v51 = vcvt.s32.f32 %v50
    %v52 = vsel %vm43, 2, 5
    %vm53 = vcmp.gt.s32.totalorder %v40, %v52
    %v54 = vsel %vm53, 1, 0
    %v55 = vcvt.s32.f32 %v54
    %v56 = vsel %vm43, 3, 4
    %vm57 = vcmp.gt.s32.totalorder %v40, %v56
    %v58 = vsel %vm57, 1, 0
    %v59 = vcvt.s32.f32 %v58
    %v60 = vsel %vm43, 4, 3
    %vm61 = vcmp.gt.s32.totalorder %v40, %v60
    %v62 = vsel %vm61, 1, 0
    %v63 = vcvt.s32.f32 %v62
    %v64 = vsel %vm43, 5, 2
    %vm65 = vcmp.gt.s32.totalorder %v40, %v64
    %v66 = vsel %vm65, 1, 0
    %v67 = vcvt.s32.f32 %v66
    %v68 = vsel %vm43, 6, 1
    %vm69 = vcmp.gt.s32.totalorder %v40, %v68
    %v70 = vsel %vm69, 1, 0
    %v71 = vcvt.s32.f32 %v70
    %v72 = vsel %vm43, 7, 0
    %vm73 = vcmp.gt.s32.totalorder %v40, %v72
    %v74 = vsel %vm73, 1, 0
    %v75 = vcvt.s32.f32 %v74
    %v76 = vld [vmem:[%s0] sm:$0xff]
    %v85 = vunpack.c.l.b16 %v22
    %v86 = vunpack.c.h.b16 %v22
    %v87 = vunpack.c.l.b16 %v23
    %v88 = vunpack.c.h.b16 %v23
    %v89 = vunpack.c.l.b16 %v24
    %v90 = vunpack.c.h.b16 %v24
    %v91 = vunpack.c.l.b16 %v25
    %v92 = vunpack.c.h.b16 %v25
    %v93 = vunpack.c.l.b16 %v26
    %v94 = vunpack.c.h.b16 %v26
    %v95 = vunpack.c.l.b16 %v27
    %v96 = vunpack.c.h.b16 %v27
    %v97 = vunpack.c.l.b16 %v28
    %v98 = vunpack.c.h.b16 %v28
    %v99 = vunpack.c.l.b16 %v29
    %v100 = vunpack.c.h.b16 %v29
    %v101 = vpack.c.b16 %v87, %v85
    %v102 = vpack.c.b16 %v88, %v86
    %v103 = vpack.c.b16 %v91, %v89
    %v104 = vpack.c.b16 %v92, %v90
    %v105 = vpack.c.b16 %v95, %v93
    %v106 = vpack.c.b16 %v96, %v94
    %v107 = vpack.c.b16 %v99, %v97
    %v108 = vpack.c.b16 %v100, %v98
    %vm117 = vcmask 523264
    %v119 = vsel %vm117, 0, 0
    %121 = vmatprep.subr.bf16.mxu0 %v102
    %122 = vmatpush1.bf16.msra.mxu0 %v101
    %123 = vmatprep.subr.bf16.mxu0 %v104
    %124 = vmatpush1.bf16.msra.mxu0 %v103
    %125 = vmatprep.subr.bf16.mxu0 %v106
    %126 = vmatpush1.bf16.msra.mxu0 %v105
    %127 = vmatprep.subr.bf16.mxu0 %v108
    %128 = vmatpush1.bf16.msra.mxu0 %v107
    %129 = vmatprep.subr.bf16.mxu0 0
    %130 = vmatpush1.bf16.msra.mxu0 0
    %131 = vmatprep.subr.bf16.mxu0 0
    %132 = vmatpush1.bf16.msra.mxu0 0
    %133 = vmatprep.subr.bf16.mxu0 0
    %134 = vmatpush1.bf16.msra.mxu0 0
    %135 = vmatprep.subr.bf16.mxu0 0
    %136 = vmatpush1.bf16.msra.mxu0 0
    %137 = vmatprep.subr.bf16.mxu0 0
    %138 = vmatpush1.bf16.msra.mxu0 0
    %139 = vmatprep.subr.bf16.mxu0 0
    %140 = vmatpush1.bf16.msra.mxu0 0
    %141 = vmatprep.subr.bf16.mxu0 0
    %142 = vmatpush1.bf16.msra.mxu0 0
    %143 = vmatprep.subr.bf16.mxu0 0
    %144 = vmatpush1.bf16.msra.mxu0 0
    %145 = vmatprep.subr.bf16.mxu0 0
    %146 = vmatpush1.bf16.msra.mxu0 0
    %147 = vmatprep.subr.bf16.mxu0 0
    %148 = vmatpush1.bf16.msra.mxu0 0
    %149 = vmatprep.subr.bf16.mxu0 0
    %150 = vmatpush1.bf16.msra.mxu0 0
    %151 = vmatprep.subr.bf16.mxu0 0
    %152 = vmatpush1.bf16.msra.mxu0 0
    %153 = vmatprep.mubr.bf16.mxu0 0
    %154 = vmatmul.mubr.bf16.gmra.mrb[0].mxu0 %v119
    %v155 = vpop.f32.mrb[0].mxu0
    %v156 = vadd.f32 0.0, %v155
    %v157 = vpop.f32.mrb[0].mxu0
    %v158 = vadd.f32 0.0, %v157
    %v159 = vpop.f32.mrb[0].mxu0
    %v160 = vpop.f32.mrb[0].mxu0
    %161 = vdwg.mxu0
    %v162 = vadd.f32 %v76, %v156
    %v163 = vxor.u32 %v162, 2147483648
    %v164 = vmul.f32 %v163, 1.442695
    %v165 = vpow.pop %v164
    %v166 = vadd.f32 %v165, 1.0
    %v167 = vrcp.pop %v166
    %v168 = vmul.f32 1.0, %v167
    %v169 = vadd.f32 %v158, %v35
    %v170 = vmul.f32 %v168, %v169
    %v172 = vrot.slane %v76, 4
    %v174 = vadd.f32 %v172, %v170
    %v175 = vtanh.pop %v174
    %v176 = vsub.f32 1.0, %v168
    %178 = vrot.lane.b32.xlu0 %v175, 64
    %v179 = vpop.permute.xlu0 %178
    %v181 = vmul.f32 %v176, %v179
    %v182 = vmul.f32 %v168, 0.0
    %v183 = vadd.f32 %v181, %v182
    %185 = vrot.lane.b32.xlu0 %v183, 64
    %v186 = vpop.permute.xlu0 %185
    %v188 = vmul.f32 %v47, %v186
    %v189 = vsub.f32 1.0, %v47
    %v190 = vmul.f32 %v189, 0.0
    %v191 = vadd.f32 %v188, %v190
    %vm192 = vcmask 257024
    %193 = vst.msk [vmem:[#allocation2] sm:$0xf] %vm192, %v188
    %195 = vrot.lane.b32.xlu0 %v188, 96
    %v196 = vpop.permute.xlu0 %195
    %s198 = scalar_lea.vmem [#allocation2], 28
    %199 = vst.msk [vmem:[%s198] sm:$0xf] %vm192, %v196
    %s200 = scalar_lea.vmem %s0, 8
    %v201 = vld [vmem:[%s200] sm:$0xff]
    %v202 = vpack.c.bf16 %v191, %v191
    %v204 = vsel %vm117, %v202, 0
    %206 = vmatprep.subr.bf16.mxu0 %v102
    %207 = vmatpush1.bf16.msra.mxu0 %v101
    %208 = vmatprep.subr.bf16.mxu0 %v104
    %209 = vmatpush1.bf16.msra.mxu0 %v103
    %210 = vmatprep.subr.bf16.mxu0 %v106
    %211 = vmatpush1.bf16.msra.mxu0 %v105
    %212 = vmatprep.subr.bf16.mxu0 %v108
    %213 = vmatpush1.bf16.msra.mxu0 %v107
    %214 = vmatprep.subr.bf16.mxu0 0
    %215 = vmatpush1.bf16.msra.mxu0 0
    %216 = vmatprep.subr.bf16.mxu0 0
    %217 = vmatpush1.bf16.msra.mxu0 0
    %218 = vmatprep.subr.bf16.mxu0 0
    %219 = vmatpush1.bf16.msra.mxu0 0
    %220 = vmatprep.subr.bf16.mxu0 0
    %221 = vmatpush1.bf16.msra.mxu0 0
    %222 = vmatprep.subr.bf16.mxu0 0
    %223 = vmatpush1.bf16.msra.mxu0 0
    %224 = vmatprep.subr.bf16.mxu0 0
    %225 = vmatpush1.bf16.msra.mxu0 0
    %226 = vmatprep.subr.bf16.mxu0 0
    %227 = vmatpush1.bf16.msra.mxu0 0
    %228 = vmatprep.subr.bf16.mxu0 0
    %229 = vmatpush1.bf16.msra.mxu0 0
    %230 = vmatprep.subr.bf16.mxu0 0
    %231 = vmatpush1.bf16.msra.mxu0 0
    %232 = vmatprep.subr.bf16.mxu0 0
    %233 = vmatpush1.bf16.msra.mxu0 0
    %234 = vmatprep.subr.bf16.mxu0 0
    %235 = vmatpush1.bf16.msra.mxu0 0
    %236 = vmatprep.subr.bf16.mxu0 0
    %237 = vmatpush1.bf16.msra.mxu0 0
    %238 = vmatprep.mubr.bf16.mxu0 0
    %239 = vmatmul.mubr.bf16.gmra.mrb[0].mxu0 %v204
    %v240 = vpop.f32.mrb[0].mxu0
    %v241 = vadd.f32 0.0, %v240
    %v242 = vpop.f32.mrb[0].mxu0
    %v243 = vadd.f32 0.0, %v242
    %v244 = vpop.f32.mrb[0].mxu0
    %v245 = vpop.f32.mrb[0].mxu0
    %246 = vdwg.mxu0
    %v247 = vadd.f32 %v201, %v241
    %v248 = vxor.u32 %v247, 2147483648
    %v249 = vmul.f32 %v248, 1.442695
    %v250 = vpow.pop %v249
    %v251 = vadd.f32 %v250, 1.0
    %v252 = vrcp.pop %v251
    %v253 = vmul.f32 1.0, %v252
    %v254 = vadd.f32 %v243, %v35
    %v255 = vmul.f32 %v253, %v254
    %v257 = vrot.slane %v201, 4
    %v259 = vadd.f32 %v257, %v255
    %v260 = vtanh.pop %v259
    %v261 = vsub.f32 1.0, %v253
    %263 = vrot.lane.b32.xlu0 %v260, 64
    %v264 = vpop.permute.xlu0 %263
    %v266 = vmul.f32 %v261, %v264
    %268 = vrot.lane.b32.xlu0 %v191, 64
    %v269 = vpop.permute.xlu0 %268
    %v271 = vmul.f32 %v253, %v269
    %v272 = vadd.f32 %v266, %v271
    %274 = vrot.lane.b32.xlu0 %v272, 64
    %v275 = vpop.permute.xlu0 %274
    %v277 = vmul.f32 %v51, %v275
    %v278 = vsub.f32 1.0, %v51
    %v279 = vmul.f32 %v278, %v191
    %v280 = vadd.f32 %v277, %v279
    %s281 = scalar_lea.vmem [#allocation2], 4
    %282 = vst.msk [vmem:[%s281] sm:$0xf] %vm192, %v277
    %284 = vrot.lane.b32.xlu0 %v277, 96
    %v285 = vpop.permute.xlu0 %284
    %s287 = scalar_lea.vmem [#allocation2], 24
    %288 = vst.msk [vmem:[%s287] sm:$0xf] %vm192, %v285
    %s289 = scalar_lea.vmem %s0, 16
    %v290 = vld [vmem:[%s289] sm:$0xff]
    %v291 = vpack.c.bf16 %v280, %v280
    %v293 = vsel %vm117, %v291, 0
    %295 = vmatprep.subr.bf16.mxu0 %v102
    %296 = vmatpush1.bf16.msra.mxu0 %v101
    %297 = vmatprep.subr.bf16.mxu0 %v104
    %298 = vmatpush1.bf16.msra.mxu0 %v103
    %299 = vmatprep.subr.bf16.mxu0 %v106
    %300 = vmatpush1.bf16.msra.mxu0 %v105
    %301 = vmatprep.subr.bf16.mxu0 %v108
    %302 = vmatpush1.bf16.msra.mxu0 %v107
    %303 = vmatprep.subr.bf16.mxu0 0
    %304 = vmatpush1.bf16.msra.mxu0 0
    %305 = vmatprep.subr.bf16.mxu0 0
    %306 = vmatpush1.bf16.msra.mxu0 0
    %307 = vmatprep.subr.bf16.mxu0 0
    %308 = vmatpush1.bf16.msra.mxu0 0
    %309 = vmatprep.subr.bf16.mxu0 0
    %310 = vmatpush1.bf16.msra.mxu0 0
    %311 = vmatprep.subr.bf16.mxu0 0
    %312 = vmatpush1.bf16.msra.mxu0 0
    %313 = vmatprep.subr.bf16.mxu0 0
    %314 = vmatpush1.bf16.msra.mxu0 0
    %315 = vmatprep.subr.bf16.mxu0 0
    %316 = vmatpush1.bf16.msra.mxu0 0
    %317 = vmatprep.subr.bf16.mxu0 0
    %318 = vmatpush1.bf16.msra.mxu0 0
    %319 = vmatprep.subr.bf16.mxu0 0
    %320 = vmatpush1.bf16.msra.mxu0 0
    %321 = vmatprep.subr.bf16.mxu0 0
    %322 = vmatpush1.bf16.msra.mxu0 0
    %323 = vmatprep.subr.bf16.mxu0 0
    %324 = vmatpush1.bf16.msra.mxu0 0
    %325 = vmatprep.subr.bf16.mxu0 0
    %326 = vmatpush1.bf16.msra.mxu0 0
    %327 = vmatprep.mubr.bf16.mxu0 0
    %328 = vmatmul.mubr.bf16.gmra.mrb[0].mxu0 %v293
    %v329 = vpop.f32.mrb[0].mxu0
    %v330 = vadd.f32 0.0, %v329
    %v331 = vpop.f32.mrb[0].mxu0
    %v332 = vadd.f32 0.0, %v331
    %v333 = vpop.f32.mrb[0].mxu0
    %v334 = vpop.f32.mrb[0].mxu0
    %335 = vdwg.mxu0
    %v336 = vadd.f32 %v290, %v330
    %v337 = vxor.u32 %v336, 2147483648
    %v338 = vmul.f32 %v337, 1.442695
    %v339 = vpow.pop %v338
    %v340 = vadd.f32 %v339, 1.0
    %v341 = vrcp.pop %v340
    %v342 = vmul.f32 1.0, %v341
    %v343 = vadd.f32 %v332, %v35
    %v344 = vmul.f32 %v342, %v343
    %v346 = vrot.slane %v290, 4
    %v348 = vadd.f32 %v346, %v344
    %v349 = vtanh.pop %v348
    %v350 = vsub.f32 1.0, %v342
    %352 = vrot.lane.b32.xlu0 %v349, 64
    %v353 = vpop.permute.xlu0 %352
    %v355 = vmul.f32 %v350, %v353
    %357 = vrot.lane.b32.xlu0 %v280, 64
    %v358 = vpop.permute.xlu0 %357
    %v360 = vmul.f32 %v342, %v358
    %v361 = vadd.f32 %v355, %v360
    %363 = vrot.lane.b32.xlu0 %v361, 64
    %v364 = vpop.permute.xlu0 %363
    %v366 = vmul.f32 %v55, %v364
    %v367 = vsub.f32 1.0, %v55
    %v368 = vmul.f32 %v367, %v280
    %v369 = vadd.f32 %v366, %v368
    %s370 = scalar_lea.vmem [#allocation2], 8
    %371 = vst.msk [vmem:[%s370] sm:$0xf] %vm192, %v366
    %373 = vrot.lane.b32.xlu0 %v366, 96
    %v374 = vpop.permute.xlu0 %373
    %s376 = scalar_lea.vmem [#allocation2], 20
    %377 = vst.msk [vmem:[%s376] sm:$0xf] %vm192, %v374
    %s378 = scalar_lea.vmem %s0, 24
    %v379 = vld [vmem:[%s378] sm:$0xff]
    %v380 = vpack.c.bf16 %v369, %v369
    %v382 = vsel %vm117, %v380, 0
    %384 = vmatprep.subr.bf16.mxu0 %v102
    %385 = vmatpush1.bf16.msra.mxu0 %v101
    %386 = vmatprep.subr.bf16.mxu0 %v104
    %387 = vmatpush1.bf16.msra.mxu0 %v103
    %388 = vmatprep.subr.bf16.mxu0 %v106
    %389 = vmatpush1.bf16.msra.mxu0 %v105
    %390 = vmatprep.subr.bf16.mxu0 %v108
    %391 = vmatpush1.bf16.msra.mxu0 %v107
    %392 = vmatprep.subr.bf16.mxu0 0
    %393 = vmatpush1.bf16.msra.mxu0 0
    %394 = vmatprep.subr.bf16.mxu0 0
    %395 = vmatpush1.bf16.msra.mxu0 0
    %396 = vmatprep.subr.bf16.mxu0 0
    %397 = vmatpush1.bf16.msra.mxu0 0
    %398 = vmatprep.subr.bf16.mxu0 0
    %399 = vmatpush1.bf16.msra.mxu0 0
    %400 = vmatprep.subr.bf16.mxu0 0
    %401 = vmatpush1.bf16.msra.mxu0 0
    %402 = vmatprep.subr.bf16.mxu0 0
    %403 = vmatpush1.bf16.msra.mxu0 0
    %404 = vmatprep.subr.bf16.mxu0 0
    %405 = vmatpush1.bf16.msra.mxu0 0
    %406 = vmatprep.subr.bf16.mxu0 0
    %407 = vmatpush1.bf16.msra.mxu0 0
    %408 = vmatprep.subr.bf16.mxu0 0
    %409 = vmatpush1.bf16.msra.mxu0 0
    %410 = vmatprep.subr.bf16.mxu0 0
    %411 = vmatpush1.bf16.msra.mxu0 0
    %412 = vmatprep.subr.bf16.mxu0 0
    %413 = vmatpush1.bf16.msra.mxu0 0
    %414 = vmatprep.subr.bf16.mxu0 0
    %415 = vmatpush1.bf16.msra.mxu0 0
    %416 = vmatprep.mubr.bf16.mxu0 0
    %417 = vmatmul.mubr.bf16.gmra.mrb[0].mxu0 %v382
    %v418 = vpop.f32.mrb[0].mxu0
    %v419 = vadd.f32 0.0, %v418
    %v420 = vpop.f32.mrb[0].mxu0
    %v421 = vadd.f32 0.0, %v420
    %v422 = vpop.f32.mrb[0].mxu0
    %v423 = vpop.f32.mrb[0].mxu0
    %424 = vdwg.mxu0
    %v425 = vadd.f32 %v379, %v419
    %v426 = vxor.u32 %v425, 2147483648
    %v427 = vmul.f32 %v426, 1.442695
    %v428 = vpow.pop %v427
    %v429 = vadd.f32 %v428, 1.0
    %v430 = vrcp.pop %v429
    %v431 = vmul.f32 1.0, %v430
    %v432 = vadd.f32 %v421, %v35
    %v433 = vmul.f32 %v431, %v432
    %v435 = vrot.slane %v379, 4
    %v437 = vadd.f32 %v435, %v433
    %v438 = vtanh.pop %v437
    %v439 = vsub.f32 1.0, %v431
    %441 = vrot.lane.b32.xlu0 %v438, 64
    %v442 = vpop.permute.xlu0 %441
    %v444 = vmul.f32 %v439, %v442
    %446 = vrot.lane.b32.xlu0 %v369, 64
    %v447 = vpop.permute.xlu0 %446
    %v449 = vmul.f32 %v431, %v447
    %v450 = vadd.f32 %v444, %v449
    %452 = vrot.lane.b32.xlu0 %v450, 64
    %v453 = vpop.permute.xlu0 %452
    %v455 = vmul.f32 %v59, %v453
    %v456 = vsub.f32 1.0, %v59
    %v457 = vmul.f32 %v456, %v369
    %v458 = vadd.f32 %v455, %v457
    %s459 = scalar_lea.vmem [#allocation2], 12
    %460 = vst.msk [vmem:[%s459] sm:$0xf] %vm192, %v455
    %462 = vrot.lane.b32.xlu0 %v455, 96
    %v463 = vpop.permute.xlu0 %462
    %s465 = scalar_lea.vmem [#allocation2], 16
    %466 = vst.msk [vmem:[%s465] sm:$0xf] %vm192, %v463
    %s467 = scalar_lea.vmem %s0, 32
    %v468 = vld [vmem:[%s467] sm:$0xff]
    %v469 = vpack.c.bf16 %v458, %v458
    %v471 = vsel %vm117, %v469, 0
    %473 = vmatprep.subr.bf16.mxu0 %v102
    %474 = vmatpush1.bf16.msra.mxu0 %v101
    %475 = vmatprep.subr.bf16.mxu0 %v104
    %476 = vmatpush1.bf16.msra.mxu0 %v103
    %477 = vmatprep.subr.bf16.mxu0 %v106
    %478 = vmatpush1.bf16.msra.mxu0 %v105
    %479 = vmatprep.subr.bf16.mxu0 %v108
    %480 = vmatpush1.bf16.msra.mxu0 %v107
    %481 = vmatprep.subr.bf16.mxu0 0
    %482 = vmatpush1.bf16.msra.mxu0 0
    %483 = vmatprep.subr.bf16.mxu0 0
    %484 = vmatpush1.bf16.msra.mxu0 0
    %485 = vmatprep.subr.bf16.mxu0 0
    %486 = vmatpush1.bf16.msra.mxu0 0
    %487 = vmatprep.subr.bf16.mxu0 0
    %488 = vmatpush1.bf16.msra.mxu0 0
    %489 = vmatprep.subr.bf16.mxu0 0
    %490 = vmatpush1.bf16.msra.mxu0 0
    %491 = vmatprep.subr.bf16.mxu0 0
    %492 = vmatpush1.bf16.msra.mxu0 0
    %493 = vmatprep.subr.bf16.mxu0 0
    %494 = vmatpush1.bf16.msra.mxu0 0
    %495 = vmatprep.subr.bf16.mxu0 0
    %496 = vmatpush1.bf16.msra.mxu0 0
    %497 = vmatprep.subr.bf16.mxu0 0
    %498 = vmatpush1.bf16.msra.mxu0 0
    %499 = vmatprep.subr.bf16.mxu0 0
    %500 = vmatpush1.bf16.msra.mxu0 0
    %501 = vmatprep.subr.bf16.mxu0 0
    %502 = vmatpush1.bf16.msra.mxu0 0
    %503 = vmatprep.subr.bf16.mxu0 0
    %504 = vmatpush1.bf16.msra.mxu0 0
    %505 = vmatprep.mubr.bf16.mxu0 0
    %506 = vmatmul.mubr.bf16.gmra.mrb[0].mxu0 %v471
    %v507 = vpop.f32.mrb[0].mxu0
    %v508 = vadd.f32 0.0, %v507
    %v509 = vpop.f32.mrb[0].mxu0
    %v510 = vadd.f32 0.0, %v509
    %v511 = vpop.f32.mrb[0].mxu0
    %v512 = vpop.f32.mrb[0].mxu0
    %513 = vdwg.mxu0
    %v514 = vadd.f32 %v468, %v508
    %v515 = vxor.u32 %v514, 2147483648
    %v516 = vmul.f32 %v515, 1.442695
    %v517 = vpow.pop %v516
    %v518 = vadd.f32 %v517, 1.0
    %v519 = vrcp.pop %v518
    %v520 = vmul.f32 1.0, %v519
    %v521 = vadd.f32 %v510, %v35
    %v522 = vmul.f32 %v520, %v521
    %v524 = vrot.slane %v468, 4
    %v526 = vadd.f32 %v524, %v522
    %v527 = vtanh.pop %v526
    %v528 = vsub.f32 1.0, %v520
    %530 = vrot.lane.b32.xlu0 %v527, 64
    %v531 = vpop.permute.xlu0 %530
    %v533 = vmul.f32 %v528, %v531
    %535 = vrot.lane.b32.xlu0 %v458, 64
    %v536 = vpop.permute.xlu0 %535
    %v538 = vmul.f32 %v520, %v536
    %v539 = vadd.f32 %v533, %v538
    %541 = vrot.lane.b32.xlu0 %v539, 64
    %v542 = vpop.permute.xlu0 %541
    %v544 = vmul.f32 %v63, %v542
    %v545 = vsub.f32 1.0, %v63
    %v546 = vmul.f32 %v545, %v458
    %v547 = vadd.f32 %v544, %v546
    %v548 = vld [vmem:[%s465] sm:$0xf]
    %v549 = vadd.f32 %v548, %v544
    %550 = vst.msk [vmem:[%s465] sm:$0xf] %vm192, %v549
    %v551 = vld [vmem:[%s459] sm:$0xf]
    %553 = vrot.lane.b32.xlu0 %v544, 96
    %v554 = vpop.permute.xlu0 %553
    %v556 = vadd.f32 %v551, %v554
    %557 = vst.msk [vmem:[%s459] sm:$0xf] %vm192, %v556
    %s558 = scalar_lea.vmem %s0, 40
    %v559 = vld [vmem:[%s558] sm:$0xff]
    %v560 = vpack.c.bf16 %v547, %v547
    %v562 = vsel %vm117, %v560, 0
    %564 = vmatprep.subr.bf16.mxu0 %v102
    %565 = vmatpush1.bf16.msra.mxu0 %v101
    %566 = vmatprep.subr.bf16.mxu0 %v104
    %567 = vmatpush1.bf16.msra.mxu0 %v103
    %568 = vmatprep.subr.bf16.mxu0 %v106
    %569 = vmatpush1.bf16.msra.mxu0 %v105
    %570 = vmatprep.subr.bf16.mxu0 %v108
    %571 = vmatpush1.bf16.msra.mxu0 %v107
    %572 = vmatprep.subr.bf16.mxu0 0
    %573 = vmatpush1.bf16.msra.mxu0 0
    %574 = vmatprep.subr.bf16.mxu0 0
    %575 = vmatpush1.bf16.msra.mxu0 0
    %576 = vmatprep.subr.bf16.mxu0 0
    %577 = vmatpush1.bf16.msra.mxu0 0
    %578 = vmatprep.subr.bf16.mxu0 0
    %579 = vmatpush1.bf16.msra.mxu0 0
    %580 = vmatprep.subr.bf16.mxu0 0
    %581 = vmatpush1.bf16.msra.mxu0 0
    %582 = vmatprep.subr.bf16.mxu0 0
    %583 = vmatpush1.bf16.msra.mxu0 0
    %584 = vmatprep.subr.bf16.mxu0 0
    %585 = vmatpush1.bf16.msra.mxu0 0
    %586 = vmatprep.subr.bf16.mxu0 0
    %587 = vmatpush1.bf16.msra.mxu0 0
    %588 = vmatprep.subr.bf16.mxu0 0
    %589 = vmatpush1.bf16.msra.mxu0 0
    %590 = vmatprep.subr.bf16.mxu0 0
    %591 = vmatpush1.bf16.msra.mxu0 0
    %592 = vmatprep.subr.bf16.mxu0 0
    %593 = vmatpush1.bf16.msra.mxu0 0
    %594 = vmatprep.subr.bf16.mxu0 0
    %595 = vmatpush1.bf16.msra.mxu0 0
    %596 = vmatprep.mubr.bf16.mxu0 0
    %597 = vmatmul.mubr.bf16.gmra.mrb[0].mxu0 %v562
    %v598 = vpop.f32.mrb[0].mxu0
    %v599 = vadd.f32 0.0, %v598
    %v600 = vpop.f32.mrb[0].mxu0
    %v601 = vadd.f32 0.0, %v600
    %v602 = vpop.f32.mrb[0].mxu0
    %v603 = vpop.f32.mrb[0].mxu0
    %604 = vdwg.mxu0
    %v605 = vadd.f32 %v559, %v599
    %v606 = vxor.u32 %v605, 2147483648
    %v607 = vmul.f32 %v606, 1.442695
    %v608 = vpow.pop %v607
    %v609 = vadd.f32 %v608, 1.0
    %v610 = vrcp.pop %v609
    %v611 = vmul.f32 1.0, %v610
    %v612 = vadd.f32 %v601, %v35
    %v613 = vmul.f32 %v611, %v612
    %v615 = vrot.slane %v559, 4
    %v617 = vadd.f32 %v615, %v613
    %v618 = vtanh.pop %v617
    %v619 = vsub.f32 1.0, %v611
    %621 = vrot.lane.b32.xlu0 %v618, 64
    %v622 = vpop.permute.xlu0 %621
    %v624 = vmul.f32 %v619, %v622
    %626 = vrot.lane.b32.xlu0 %v547, 64
    %v627 = vpop.permute.xlu0 %626
    %v629 = vmul.f32 %v611, %v627
    %v630 = vadd.f32 %v624, %v629
    %632 = vrot.lane.b32.xlu0 %v630, 64
    %v633 = vpop.permute.xlu0 %632
    %v635 = vmul.f32 %v67, %v633
    %v636 = vsub.f32 1.0, %v67
    %v637 = vmul.f32 %v636, %v547
    %v638 = vadd.f32 %v635, %v637
    %v639 = vld [vmem:[%s376] sm:$0xf]
    %v640 = vadd.f32 %v639, %v635
    %641 = vst.msk [vmem:[%s376] sm:$0xf] %vm192, %v640
    %v642 = vld [vmem:[%s370] sm:$0xf]
    %644 = vrot.lane.b32.xlu0 %v635, 96
    %v645 = vpop.permute.xlu0 %644
    %v647 = vadd.f32 %v642, %v645
    %648 = vst.msk [vmem:[%s370] sm:$0xf] %vm192, %v647
    %s649 = scalar_lea.vmem %s0, 48
    %v650 = vld [vmem:[%s649] sm:$0xff]
    %v651 = vpack.c.bf16 %v638, %v638
    %v653 = vsel %vm117, %v651, 0
    %655 = vmatprep.subr.bf16.mxu0 %v102
    %656 = vmatpush1.bf16.msra.mxu0 %v101
    %657 = vmatprep.subr.bf16.mxu0 %v104
    %658 = vmatpush1.bf16.msra.mxu0 %v103
    %659 = vmatprep.subr.bf16.mxu0 %v106
    %660 = vmatpush1.bf16.msra.mxu0 %v105
    %661 = vmatprep.subr.bf16.mxu0 %v108
    %662 = vmatpush1.bf16.msra.mxu0 %v107
    %663 = vmatprep.subr.bf16.mxu0 0
    %664 = vmatpush1.bf16.msra.mxu0 0
    %665 = vmatprep.subr.bf16.mxu0 0
    %666 = vmatpush1.bf16.msra.mxu0 0
    %667 = vmatprep.subr.bf16.mxu0 0
    %668 = vmatpush1.bf16.msra.mxu0 0
    %669 = vmatprep.subr.bf16.mxu0 0
    %670 = vmatpush1.bf16.msra.mxu0 0
    %671 = vmatprep.subr.bf16.mxu0 0
    %672 = vmatpush1.bf16.msra.mxu0 0
    %673 = vmatprep.subr.bf16.mxu0 0
    %674 = vmatpush1.bf16.msra.mxu0 0
    %675 = vmatprep.subr.bf16.mxu0 0
    %676 = vmatpush1.bf16.msra.mxu0 0
    %677 = vmatprep.subr.bf16.mxu0 0
    %678 = vmatpush1.bf16.msra.mxu0 0
    %679 = vmatprep.subr.bf16.mxu0 0
    %680 = vmatpush1.bf16.msra.mxu0 0
    %681 = vmatprep.subr.bf16.mxu0 0
    %682 = vmatpush1.bf16.msra.mxu0 0
    %683 = vmatprep.subr.bf16.mxu0 0
    %684 = vmatpush1.bf16.msra.mxu0 0
    %685 = vmatprep.subr.bf16.mxu0 0
    %686 = vmatpush1.bf16.msra.mxu0 0
    %687 = vmatprep.mubr.bf16.mxu0 0
    %688 = vmatmul.mubr.bf16.gmra.mrb[0].mxu0 %v653
    %v689 = vpop.f32.mrb[0].mxu0
    %v690 = vadd.f32 0.0, %v689
    %v691 = vpop.f32.mrb[0].mxu0
    %v692 = vadd.f32 0.0, %v691
    %v693 = vpop.f32.mrb[0].mxu0
    %v694 = vpop.f32.mrb[0].mxu0
    %695 = vdwg.mxu0
    %v696 = vadd.f32 %v650, %v690
    %v697 = vxor.u32 %v696, 2147483648
    %v698 = vmul.f32 %v697, 1.442695
    %v699 = vpow.pop %v698
    %v700 = vadd.f32 %v699, 1.0
    %v701 = vrcp.pop %v700
    %v702 = vmul.f32 1.0, %v701
    %v703 = vadd.f32 %v692, %v35
    %v704 = vmul.f32 %v702, %v703
    %v706 = vrot.slane %v650, 4
    %v708 = vadd.f32 %v706, %v704
    %v709 = vtanh.pop %v708
    %v710 = vsub.f32 1.0, %v702
    %712 = vrot.lane.b32.xlu0 %v709, 64
    %v713 = vpop.permute.xlu0 %712
    %v715 = vmul.f32 %v710, %v713
    %717 = vrot.lane.b32.xlu0 %v638, 64
    %v718 = vpop.permute.xlu0 %717
    %v720 = vmul.f32 %v702, %v718
    %v721 = vadd.f32 %v715, %v720
    %723 = vrot.lane.b32.xlu0 %v721, 64
    %v724 = vpop.permute.xlu0 %723
    %v726 = vmul.f32 %v71, %v724
    %v727 = vsub.f32 1.0, %v71
    %v728 = vmul.f32 %v727, %v638
    %v729 = vadd.f32 %v726, %v728
    %v730 = vld [vmem:[%s287] sm:$0xf]
    %v731 = vadd.f32 %v730, %v726
    %732 = vst.msk [vmem:[%s287] sm:$0xf] %vm192, %v731
    %v733 = vld [vmem:[%s281] sm:$0xf]
    %735 = vrot.lane.b32.xlu0 %v726, 96
    %v736 = vpop.permute.xlu0 %735
    %v738 = vadd.f32 %v733, %v736
    %739 = vst.msk [vmem:[%s281] sm:$0xf] %vm192, %v738
    %s740 = scalar_lea.vmem %s0, 56
    %v741 = vld [vmem:[%s740] sm:$0xff]
    %v742 = vpack.c.bf16 %v729, %v729
    %v744 = vsel %vm117, %v742, 0
    %746 = vmatprep.subr.bf16.mxu0 %v102
    %747 = vmatpush1.bf16.msra.mxu0 %v101
    %748 = vmatprep.subr.bf16.mxu0 %v104
    %749 = vmatpush1.bf16.msra.mxu0 %v103
    %750 = vmatprep.subr.bf16.mxu0 %v106
    %751 = vmatpush1.bf16.msra.mxu0 %v105
    %752 = vmatprep.subr.bf16.mxu0 %v108
    %753 = vmatpush1.bf16.msra.mxu0 %v107
    %754 = vmatprep.subr.bf16.mxu0 0
    %755 = vmatpush1.bf16.msra.mxu0 0
    %756 = vmatprep.subr.bf16.mxu0 0
    %757 = vmatpush1.bf16.msra.mxu0 0
    %758 = vmatprep.subr.bf16.mxu0 0
    %759 = vmatpush1.bf16.msra.mxu0 0
    %760 = vmatprep.subr.bf16.mxu0 0
    %761 = vmatpush1.bf16.msra.mxu0 0
    %762 = vmatprep.subr.bf16.mxu0 0
    %763 = vmatpush1.bf16.msra.mxu0 0
    %764 = vmatprep.subr.bf16.mxu0 0
    %765 = vmatpush1.bf16.msra.mxu0 0
    %766 = vmatprep.subr.bf16.mxu0 0
    %767 = vmatpush1.bf16.msra.mxu0 0
    %768 = vmatprep.subr.bf16.mxu0 0
    %769 = vmatpush1.bf16.msra.mxu0 0
    %770 = vmatprep.subr.bf16.mxu0 0
    %771 = vmatpush1.bf16.msra.mxu0 0
    %772 = vmatprep.subr.bf16.mxu0 0
    %773 = vmatpush1.bf16.msra.mxu0 0
    %774 = vmatprep.subr.bf16.mxu0 0
    %775 = vmatpush1.bf16.msra.mxu0 0
    %776 = vmatprep.subr.bf16.mxu0 0
    %777 = vmatpush1.bf16.msra.mxu0 0
    %778 = vmatprep.mubr.bf16.mxu0 0
    %779 = vmatmul.mubr.bf16.gmra.mrb[0].mxu0 %v744
    %v780 = vpop.f32.mrb[0].mxu0
    %v781 = vadd.f32 0.0, %v780
    %v782 = vpop.f32.mrb[0].mxu0
    %v783 = vadd.f32 0.0, %v782
    %v784 = vpop.f32.mrb[0].mxu0
    %v785 = vpop.f32.mrb[0].mxu0
    %786 = vdwg.mxu0
    %v787 = vadd.f32 %v741, %v781
    %v788 = vxor.u32 %v787, 2147483648
    %v789 = vmul.f32 %v788, 1.442695
    %v790 = vpow.pop %v789
    %v791 = vadd.f32 %v790, 1.0
    %v792 = vrcp.pop %v791
    %v793 = vmul.f32 1.0, %v792
    %v794 = vadd.f32 %v783, %v35
    %v795 = vmul.f32 %v793, %v794
    %v797 = vrot.slane %v741, 4
    %v799 = vadd.f32 %v797, %v795
    %v800 = vtanh.pop %v799
    %v801 = vsub.f32 1.0, %v793
    %803 = vrot.lane.b32.xlu0 %v800, 64
    %v804 = vpop.permute.xlu0 %803
    %v806 = vmul.f32 %v801, %v804
    %808 = vrot.lane.b32.xlu0 %v729, 64
    %v809 = vpop.permute.xlu0 %808
    %v811 = vmul.f32 %v793, %v809
    %v812 = vadd.f32 %v806, %v811
    %814 = vrot.lane.b32.xlu0 %v812, 64
    %v815 = vpop.permute.xlu0 %814
    %v817 = vmul.f32 %v75, %v815
    %v818 = vsub.f32 1.0, %v75
    %v819 = vmul.f32 %v818, %v729
    %v820 = vadd.f32 %v817, %v819
    %v821 = vld [vmem:[%s198] sm:$0xf]
    %v822 = vadd.f32 %v821, %v817
    %823 = vst.msk [vmem:[%s198] sm:$0xf] %vm192, %v822
    %v824 = vld [vmem:[#allocation2] sm:$0xf]
    %826 = vrot.lane.b32.xlu0 %v817, 96
    %v827 = vpop.permute.xlu0 %826
    %v829 = vadd.f32 %v824, %v827
    %830 = vst.msk [vmem:[#allocation2] sm:$0xf] %vm192, %v829
    %831 = vst.msk [vmem:[#allocation4] sm:$0xf] %vm192, %v820
    %833 = vrot.lane.b32.xlu0 %v820, 96
    %v834 = vpop.permute.xlu0 %833
    %s836 = scalar_lea.vmem [#allocation4], 4
    %837 = vst.msk [vmem:[%s836] sm:$0xf] %vm192, %v834
    // Predicated region
    $region18: #{encoder_rnn_forward.1} parent=1 // pred_check
      _
    $region19: #{encoder_rnn_forward.1} parent=1 // pred_check_branch
      %839 = sbr.rel (0) target = $region21
    $region20: #{encoder_rnn_forward.1} parent=1 // pred_region
      %s841 = ssub.s32 512, 512
      %842 = vsyncadd [#allocation3], %s841
      %s843 = sshll.u32 [#allocation2], 4
      %s844 = int_to_ptr.vmem [resolvable:$true] %s843
      %849 = dma.vmem_to_hbm [thread:$0]  %s844, 512, %s4, [#allocation3], 64, 64, 4
    $region21: #{encoder_rnn_forward.1} parent=1 // pred_fallthru
      _
    // Predicated region
    $region22: #{encoder_rnn_forward.1} parent=1 // pred_check
      _
    $region23: #{encoder_rnn_forward.1} parent=1 // pred_check_branch
      %851 = sbr.rel (0) target = $region25
    $region24: #{encoder_rnn_forward.1} parent=1 // pred_region
      %s853 = ssub.s32 128, 128
      %854 = vsyncadd [#allocation5], %s853
      %s855 = sshll.u32 [#allocation4], 4
      %s856 = int_to_ptr.vmem [resolvable:$true] %s855
      %861 = dma.vmem_to_hbm [thread:$0]  %s856, 128, %s5, [#allocation5], 64, 64, 4
    $region25: #{encoder_rnn_forward.1} parent=1 // pred_fallthru
      _
    // Predicated region
    $region26: #{encoder_rnn_forward.1} parent=1 // pred_check
      _
    $region27: #{encoder_rnn_forward.1} parent=1 // pred_check_branch
      %863 = sbr.rel (0) target = $region29
    $region28: #{encoder_rnn_forward.1} parent=1 // pred_region
      %864 = dma.done [#allocation3], 512
    $region29: #{encoder_rnn_forward.1} parent=1 // pred_fallthru
      _
    // Predicated region
    $region30: #{encoder_rnn_forward.1} parent=1 // pred_check
      _
    $region31: #{encoder_rnn_forward.1} parent=1 // pred_check_branch
      %866 = sbr.rel (0) target = $region33
    $region32: #{encoder_rnn_forward.1} parent=1 // pred_region
      %867 = dma.done [#allocation5], 128
    $region33: #{encoder_rnn_forward.1} parent=1 // pred_fallthru
      _
    %868 = vsyncpa [#allocation3], 1
    %869 = vsyncpa [#allocation5], 1

</llo_original>
